<compile_context>
chip_gen: v6e
topology: v6e:2x2x1
jax: 0.10.0
libtpu: 0.0.40
codegen_flags: <defaults>
</compile_context>

<pallas_src>
import math
import jax
import jax.numpy as jnp
from jax.experimental import pallas as pl
from jax.experimental.pallas import tpu as pltpu

# ---- small synthetic GPT-2 config ----
B = 2             # batch
S = 8             # sequence length
D = 32            # hidden size
H = 4             # num attention heads
HD = D // H       # head dim
INNER = 4 * D     # MLP inner dim
EPS = 1e-5        # layer_norm_epsilon
QKV_PAD = ((3 * D + 127) // 128) * 128   # c_attn output width padded to a 128-lane multiple


def _layernorm(x, g, b):
    mu = jnp.mean(x, axis=-1, keepdims=True)
    var = jnp.mean((x - mu) ** 2, axis=-1, keepdims=True)
    return (x - mu) * jax.lax.rsqrt(var + EPS) * g + b


def _gelu_new(x):
    return 0.5 * x * (1.0 + jnp.tanh(
        jnp.sqrt(2.0 / jnp.pi) * (x + 0.044715 * x ** 3)))


def gpt2_block_kernel(x_ref,
                      ln1g_ref, ln1b_ref,
                      wqkv_ref, bqkv_ref,
                      wproj_ref, bproj_ref,
                      ln2g_ref, ln2b_ref,
                      wfc_ref, bfc_ref,
                      wp2_ref, bp2_ref,
                      out_ref,
                      ctx_ref):
    x = x_ref[...]                                        # (B*S, D) — all rows at once

    # ----- ln_1 -----
    h = _layernorm(x, ln1g_ref[...], ln1b_ref[...])

    # ----- attention: c_attn (qkv projection), output padded to 128 lanes -----
    qkv = jnp.dot(h, wqkv_ref[...], preferred_element_type=jnp.float32) + bqkv_ref[...]

    # gather every (batch, head) slice into one batched tensor (B*H, S, HD)
    def heads(off):
        return jnp.stack(
            [qkv[b * S:(b + 1) * S, off + hi * HD: off + (hi + 1) * HD]
             for b in range(B) for hi in range(H)], axis=0)
    q_h = heads(0)
    k_h = heads(D)
    v_h = heads(2 * D)

    # causal mask (module.bias buffer) + scale — computed exactly once
    row = jax.lax.broadcasted_iota(jnp.int32, (S, S), 0)
    col = jax.lax.broadcasted_iota(jnp.int32, (S, S), 1)
    causal = (col <= row)[None, :, :]
    mask_value = jnp.finfo(jnp.float32).min
    inv_scale = jnp.float32(1.0 / math.sqrt(HD))          # scale_attn_weights=True

    # batched attention over all (batch, head) pairs: two dot_generals total
    s = jnp.einsum('zqd,zkd->zqk', q_h, k_h,
                   preferred_element_type=jnp.float32) * inv_scale
    s = jnp.where(causal, s, mask_value)
    s = s - jnp.max(s, axis=-1, keepdims=True)
    p = jnp.exp(s)
    p = p * pl.reciprocal(jnp.sum(p, axis=-1, keepdims=True), approx=True)
    ctx = jnp.einsum('zqk,zkd->zqd', p, v_h,
                     preferred_element_type=jnp.float32)  # (B*H, S, HD)

    # merge_heads: write each head's context at its static offset (no concatenate)
    for b in range(B):
        for hi in range(H):
            ctx_ref[b * S:(b + 1) * S, hi * HD:(hi + 1) * HD] = ctx[b * H + hi]

    # ----- attention output projection (c_proj) + residual -----
    attn_out = jnp.dot(ctx_ref[...], wproj_ref[...],
                       preferred_element_type=jnp.float32) + bproj_ref[...]
    x = x + attn_out                                      # resid_dropout identity (eval)

    # ----- ln_2 + MLP (gelu_new) + residual -----
    h2 = _layernorm(x, ln2g_ref[...], ln2b_ref[...])
    ff = jnp.dot(h2, wfc_ref[...], preferred_element_type=jnp.float32) + bfc_ref[...]
    ff = _gelu_new(ff)
    ff = jnp.dot(ff, wp2_ref[...], preferred_element_type=jnp.float32) + bp2_ref[...]
    out_ref[...] = (x + ff).astype(out_ref.dtype)         # mlp dropout identity (eval)


def gpt2_block(x, params):
    """x: (B, S, D) float32.  Returns (B, S, D)."""
    x2d = x.reshape(B * S, D)                             # flatten batch outside the kernel
    pad = QKV_PAD - 3 * D
    w_qkv_p = jnp.pad(params["w_qkv"], ((0, 0), (0, pad)))
    b_qkv_p = jnp.pad(params["b_qkv"], ((0, 0), (0, pad)))

    # Single invocation (no grid): every operand is a full-array VMEM block.
    # TODO(synk): at real GPT-2 sizes, re-grid over row blocks ("parallel", v7x dual-TC),
    # K-tile the MLP matmuls with an fp32 accumulator, and use bf16 weights for VMEM.
    out2d = pl.pallas_call(
        gpt2_block_kernel,
        out_shape=jax.ShapeDtypeStruct((B * S, D), x.dtype),
        scratch_shapes=[pltpu.VMEM((B * S, D), jnp.float32)],
    )(x2d,
      params["ln1_g"], params["ln1_b"],
      w_qkv_p, b_qkv_p,
      params["w_aproj"], params["b_aproj"],
      params["ln2_g"], params["ln2_b"],
      params["w_fc"], params["b_fc"],
      params["w_mproj"], params["b_mproj"])
    return out2d.reshape(B, S, D)


# ---------- pure-JAX reference (mirrors the PyTorch forward exactly) ----------
def gpt2_block_ref(x, p):
    def ln(h, g, b):
        mu = h.mean(-1, keepdims=True)
        var = ((h - mu) ** 2).mean(-1, keepdims=True)
        return (h - mu) / jnp.sqrt(var + EPS) * g[0] + b[0]

    h = ln(x, p["ln1_g"], p["ln1_b"])
    qkv = h @ p["w_qkv"] + p["b_qkv"][0]
    q, k, v = jnp.split(qkv, 3, axis=-1)
    def heads(t):  # (B,S,D) -> (B,H,S,HD)
        return t.reshape(B, S, H, HD).transpose(0, 2, 1, 3)
    q, k, v = heads(q), heads(k), heads(v)
    scores = jnp.einsum("bhqd,bhkd->bhqk", q, k) / math.sqrt(HD)
    causal = jnp.tril(jnp.ones((S, S), bool))
    scores = jnp.where(causal, scores, jnp.finfo(jnp.float32).min)
    w = jax.nn.softmax(scores, axis=-1)
    ctx = jnp.einsum("bhqk,bhkd->bqhd", w, v).reshape(B, S, D)
    attn_out = ctx @ p["w_aproj"] + p["b_aproj"][0]
    x = x + attn_out
    h2 = ln(x, p["ln2_g"], p["ln2_b"])
    ff = h2 @ p["w_fc"] + p["b_fc"][0]
    ff = 0.5 * ff * (1.0 + jnp.tanh(jnp.sqrt(2.0 / jnp.pi) * (ff + 0.044715 * ff ** 3)))
    ff = ff @ p["w_mproj"] + p["b_mproj"][0]
    return x + ff


if __name__ == "__main__":
    key = jax.random.PRNGKey(0)
    keys = jax.random.split(key, 16)
    f32 = jnp.float32
    params = {
        "ln1_g": jnp.ones((1, D), f32),
        "ln1_b": jnp.zeros((1, D), f32),
        "w_qkv": 0.02 * jax.random.normal(keys[1], (D, 3 * D), f32),
        "b_qkv": 0.02 * jax.random.normal(keys[2], (1, 3 * D), f32),
        "w_aproj": 0.02 * jax.random.normal(keys[3], (D, D), f32),
        "b_aproj": 0.02 * jax.random.normal(keys[4], (1, D), f32),
        "ln2_g": jnp.ones((1, D), f32),
        "ln2_b": jnp.zeros((1, D), f32),
        "w_fc": 0.02 * jax.random.normal(keys[5], (D, INNER), f32),
        "b_fc": 0.02 * jax.random.normal(keys[6], (1, INNER), f32),
        "w_mproj": 0.02 * jax.random.normal(keys[7], (INNER, D), f32),
        "b_mproj": 0.02 * jax.random.normal(keys[8], (1, D), f32),
    }
    x = jax.random.normal(keys[0], (B, S, D), f32)

    out = gpt2_block(x, params)
    out = jax.block_until_ready(out)

    ref = gpt2_block_ref(x, params)
    assert out.shape == (B, S, D)
    assert jnp.allclose(out, ref, atol=2e-4, rtol=2e-4), (
        float(jnp.max(jnp.abs(out - ref))))
    print("KERNEL_OK")
</pallas_src>

<mosaic_0001>
module attributes {stable_mosaic.version = 11 : i64} {
  func.func @gpt2_block_kernel(%arg0: memref<16x32xf32, #tpu.memory_space<vmem>>, %arg1: memref<1x32xf32, #tpu.memory_space<vmem>>, %arg2: memref<1x32xf32, #tpu.memory_space<vmem>>, %arg3: memref<32x128xf32, #tpu.memory_space<vmem>>, %arg4: memref<1x128xf32, #tpu.memory_space<vmem>>, %arg5: memref<32x32xf32, #tpu.memory_space<vmem>>, %arg6: memref<1x32xf32, #tpu.memory_space<vmem>>, %arg7: memref<1x32xf32, #tpu.memory_space<vmem>>, %arg8: memref<1x32xf32, #tpu.memory_space<vmem>>, %arg9: memref<32x128xf32, #tpu.memory_space<vmem>>, %arg10: memref<1x128xf32, #tpu.memory_space<vmem>>, %arg11: memref<128x32xf32, #tpu.memory_space<vmem>>, %arg12: memref<1x32xf32, #tpu.memory_space<vmem>>, %arg13: memref<16x32xf32, #tpu.memory_space<vmem>>, %arg14: memref<16x32xf32, #tpu.memory_space<vmem>>) attributes {dimension_semantics = [], scalar_prefetch = 0 : i64, scratch_operands = 1 : i64, tpu.core_type = #tpu.core_type<tc>} {
    %c0 = arith.constant 0 : index
    %c0_0 = arith.constant 0 : index
    %0 = vector.load %arg0[%c0, %c0_0] : memref<16x32xf32, #tpu.memory_space<vmem>>, vector<16x32xf32>
    %c0_1 = arith.constant 0 : index
    %c0_2 = arith.constant 0 : index
    %1 = vector.load %arg1[%c0_1, %c0_2] : memref<1x32xf32, #tpu.memory_space<vmem>>, vector<1x32xf32>
    %c0_3 = arith.constant 0 : index
    %c0_4 = arith.constant 0 : index
    %2 = vector.load %arg2[%c0_3, %c0_4] : memref<1x32xf32, #tpu.memory_space<vmem>>, vector<1x32xf32>
    %cst = arith.constant dense<0.000000e+00> : vector<16xf32>
    %3 = vector.multi_reduction <add>, %0, %cst [1] : vector<16x32xf32> to vector<16xf32>
    %4 = vector.shape_cast %3 : vector<16xf32> to vector<16x1xf32>
    %cst_5 = arith.constant 3.200000e+01 : f32
    %5 = vector.broadcast %cst_5 : f32 to vector<16x1xf32>
    %6 = arith.divf %4, %5 : vector<16x1xf32>
    %7 = vector.broadcast %6 : vector<16x1xf32> to vector<16x32xf32>
    %8 = arith.subf %0, %7 : vector<16x32xf32>
    %9 = arith.mulf %8, %8 : vector<16x32xf32>
    %cst_6 = arith.constant dense<0.000000e+00> : vector<16xf32>
    %10 = vector.multi_reduction <add>, %9, %cst_6 [1] : vector<16x32xf32> to vector<16xf32>
    %11 = vector.shape_cast %10 : vector<16xf32> to vector<16x1xf32>
    %cst_7 = arith.constant 3.200000e+01 : f32
    %12 = vector.broadcast %cst_7 : f32 to vector<16x1xf32>
    %13 = arith.divf %11, %12 : vector<16x1xf32>
    %14 = vector.broadcast %6 : vector<16x1xf32> to vector<16x32xf32>
    %15 = arith.subf %0, %14 : vector<16x32xf32>
    %cst_8 = arith.constant 9.99999974E-6 : f32
    %16 = vector.broadcast %cst_8 : f32 to vector<16x1xf32>
    %17 = arith.addf %13, %16 : vector<16x1xf32>
    %18 = math.rsqrt %17 : vector<16x1xf32>
    %19 = vector.broadcast %18 : vector<16x1xf32> to vector<16x32xf32>
    %20 = arith.mulf %15, %19 : vector<16x32xf32>
    %21 = vector.broadcast %1 : vector<1x32xf32> to vector<16x32xf32>
    %22 = arith.mulf %20, %21 : vector<16x32xf32>
    %23 = vector.broadcast %2 : vector<1x32xf32> to vector<16x32xf32>
    %24 = arith.addf %22, %23 : vector<16x32xf32>
    %c0_9 = arith.constant 0 : index
    %c0_10 = arith.constant 0 : index
    %25 = vector.load %arg3[%c0_9, %c0_10] : memref<32x128xf32, #tpu.memory_space<vmem>>, vector<32x128xf32>
    %cst_11 = arith.constant dense<0.000000e+00> : vector<16x128xf32>
    %26 = tpu.matmul %24, %25, %cst_11 {dimension_numbers = #tpu.dot_dimension_numbers<[1], [0], [0], [1], [0, 0, 1, 1], [], []>} : vector<16x32xf32>, vector<32x128xf32>, vector<16x128xf32> -> vector<16x128xf32>
    %c0_12 = arith.constant 0 : index
    %c0_13 = arith.constant 0 : index
    %27 = vector.load %arg4[%c0_12, %c0_13] : memref<1x128xf32, #tpu.memory_space<vmem>>, vector<1x128xf32>
    %28 = vector.broadcast %27 : vector<1x128xf32> to vector<16x128xf32>
    %29 = arith.addf %26, %28 : vector<16x128xf32>
    %30 = vector.extract_strided_slice %29 {offsets = [0, 0], sizes = [8, 8], strides = [1, 1]} : vector<16x128xf32> to vector<8x8xf32>
    %31 = vector.extract_strided_slice %29 {offsets = [0, 8], sizes = [8, 8], strides = [1, 1]} : vector<16x128xf32> to vector<8x8xf32>
    %32 = vector.extract_strided_slice %29 {offsets = [0, 16], sizes = [8, 8], strides = [1, 1]} : vector<16x128xf32> to vector<8x8xf32>
    %33 = vector.extract_strided_slice %29 {offsets = [0, 24], sizes = [8, 8], strides = [1, 1]} : vector<16x128xf32> to vector<8x8xf32>
    %34 = vector.extract_strided_slice %29 {offsets = [8, 0], sizes = [8, 8], strides = [1, 1]} : vector<16x128xf32> to vector<8x8xf32>
    %35 = vector.extract_strided_slice %29 {offsets = [8, 8], sizes = [8, 8], strides = [1, 1]} : vector<16x128xf32> to vector<8x8xf32>
    %36 = vector.extract_strided_slice %29 {offsets = [8, 16], sizes = [8, 8], strides = [1, 1]} : vector<16x128xf32> to vector<8x8xf32>
    %37 = vector.extract_strided_slice %29 {offsets = [8, 24], sizes = [8, 8], strides = [1, 1]} : vector<16x128xf32> to vector<8x8xf32>
    %38 = vector.shape_cast %30 : vector<8x8xf32> to vector<1x8x8xf32>
    %39 = vector.shape_cast %31 : vector<8x8xf32> to vector<1x8x8xf32>
    %40 = vector.shape_cast %32 : vector<8x8xf32> to vector<1x8x8xf32>
    %41 = vector.shape_cast %33 : vector<8x8xf32> to vector<1x8x8xf32>
    %42 = vector.shape_cast %34 : vector<8x8xf32> to vector<1x8x8xf32>
    %43 = vector.shape_cast %35 : vector<8x8xf32> to vector<1x8x8xf32>
    %44 = vector.shape_cast %36 : vector<8x8xf32> to vector<1x8x8xf32>
    %45 = vector.shape_cast %37 : vector<8x8xf32> to vector<1x8x8xf32>
    %46 = tpu.concatenate %38, %39, %40, %41, %42, %43, %44, %45 in 0 : vector<1x8x8xf32>, vector<1x8x8xf32>, vector<1x8x8xf32>, vector<1x8x8xf32>, vector<1x8x8xf32>, vector<1x8x8xf32>, vector<1x8x8xf32>, vector<1x8x8xf32> -> vector<8x8x8xf32>
    %47 = vector.extract_strided_slice %29 {offsets = [0, 32], sizes = [8, 8], strides = [1, 1]} : vector<16x128xf32> to vector<8x8xf32>
    %48 = vector.extract_strided_slice %29 {offsets = [0, 40], sizes = [8, 8], strides = [1, 1]} : vector<16x128xf32> to vector<8x8xf32>
    %49 = vector.extract_strided_slice %29 {offsets = [0, 48], sizes = [8, 8], strides = [1, 1]} : vector<16x128xf32> to vector<8x8xf32>
    %50 = vector.extract_strided_slice %29 {offsets = [0, 56], sizes = [8, 8], strides = [1, 1]} : vector<16x128xf32> to vector<8x8xf32>
    %51 = vector.extract_strided_slice %29 {offsets = [8, 32], sizes = [8, 8], strides = [1, 1]} : vector<16x128xf32> to vector<8x8xf32>
    %52 = vector.extract_strided_slice %29 {offsets = [8, 40], sizes = [8, 8], strides = [1, 1]} : vector<16x128xf32> to vector<8x8xf32>
    %53 = vector.extract_strided_slice %29 {offsets = [8, 48], sizes = [8, 8], strides = [1, 1]} : vector<16x128xf32> to vector<8x8xf32>
    %54 = vector.extract_strided_slice %29 {offsets = [8, 56], sizes = [8, 8], strides = [1, 1]} : vector<16x128xf32> to vector<8x8xf32>
    %55 = vector.shape_cast %47 : vector<8x8xf32> to vector<1x8x8xf32>
    %56 = vector.shape_cast %48 : vector<8x8xf32> to vector<1x8x8xf32>
    %57 = vector.shape_cast %49 : vector<8x8xf32> to vector<1x8x8xf32>
    %58 = vector.shape_cast %50 : vector<8x8xf32> to vector<1x8x8xf32>
    %59 = vector.shape_cast %51 : vector<8x8xf32> to vector<1x8x8xf32>
    %60 = vector.shape_cast %52 : vector<8x8xf32> to vector<1x8x8xf32>
    %61 = vector.shape_cast %53 : vector<8x8xf32> to vector<1x8x8xf32>
    %62 = vector.shape_cast %54 : vector<8x8xf32> to vector<1x8x8xf32>
    %63 = tpu.concatenate %55, %56, %57, %58, %59, %60, %61, %62 in 0 : vector<1x8x8xf32>, vector<1x8x8xf32>, vector<1x8x8xf32>, vector<1x8x8xf32>, vector<1x8x8xf32>, vector<1x8x8xf32>, vector<1x8x8xf32>, vector<1x8x8xf32> -> vector<8x8x8xf32>
    %64 = vector.extract_strided_slice %29 {offsets = [0, 64], sizes = [8, 8], strides = [1, 1]} : vector<16x128xf32> to vector<8x8xf32>
    %65 = vector.extract_strided_slice %29 {offsets = [0, 72], sizes = [8, 8], strides = [1, 1]} : vector<16x128xf32> to vector<8x8xf32>
    %66 = vector.extract_strided_slice %29 {offsets = [0, 80], sizes = [8, 8], strides = [1, 1]} : vector<16x128xf32> to vector<8x8xf32>
    %67 = vector.extract_strided_slice %29 {offsets = [0, 88], sizes = [8, 8], strides = [1, 1]} : vector<16x128xf32> to vector<8x8xf32>
    %68 = vector.extract_strided_slice %29 {offsets = [8, 64], sizes = [8, 8], strides = [1, 1]} : vector<16x128xf32> to vector<8x8xf32>
    %69 = vector.extract_strided_slice %29 {offsets = [8, 72], sizes = [8, 8], strides = [1, 1]} : vector<16x128xf32> to vector<8x8xf32>
    %70 = vector.extract_strided_slice %29 {offsets = [8, 80], sizes = [8, 8], strides = [1, 1]} : vector<16x128xf32> to vector<8x8xf32>
    %71 = vector.extract_strided_slice %29 {offsets = [8, 88], sizes = [8, 8], strides = [1, 1]} : vector<16x128xf32> to vector<8x8xf32>
    %72 = vector.shape_cast %64 : vector<8x8xf32> to vector<1x8x8xf32>
    %73 = vector.shape_cast %65 : vector<8x8xf32> to vector<1x8x8xf32>
    %74 = vector.shape_cast %66 : vector<8x8xf32> to vector<1x8x8xf32>
    %75 = vector.shape_cast %67 : vector<8x8xf32> to vector<1x8x8xf32>
    %76 = vector.shape_cast %68 : vector<8x8xf32> to vector<1x8x8xf32>
    %77 = vector.shape_cast %69 : vector<8x8xf32> to vector<1x8x8xf32>
    %78 = vector.shape_cast %70 : vector<8x8xf32> to vector<1x8x8xf32>
    %79 = vector.shape_cast %71 : vector<8x8xf32> to vector<1x8x8xf32>
    %80 = tpu.concatenate %72, %73, %74, %75, %76, %77, %78, %79 in 0 : vector<1x8x8xf32>, vector<1x8x8xf32>, vector<1x8x8xf32>, vector<1x8x8xf32>, vector<1x8x8xf32>, vector<1x8x8xf32>, vector<1x8x8xf32>, vector<1x8x8xf32> -> vector<8x8x8xf32>
    %81 = tpu.iota {dimensions = array<i32: 0>} : vector<8x8xi32>
    %82 = tpu.iota {dimensions = array<i32: 1>} : vector<8x8xi32>
    %83 = arith.cmpi sle, %82, %81 : vector<8x8xi32>
    %84 = vector.shape_cast %83 : vector<8x8xi1> to vector<1x8x8xi1>
    "tpu.trace_start"() <{level = 10 : i32, message = "zqd,zkd->zqk"}> : () -> ()
    %cst_14 = arith.constant dense<0.000000e+00> : vector<8x8x8xf32>
    %85 = tpu.matmul %46, %63, %cst_14 {dimension_numbers = #tpu.dot_dimension_numbers<[2], [2], [1], [1], [0, 0, 0, 1, 1, 1], [0], [0]>} : vector<8x8x8xf32>, vector<8x8x8xf32>, vector<8x8x8xf32> -> vector<8x8x8xf32>
    "tpu.trace_stop"() : () -> ()
    %cst_15 = arith.constant 0.353553385 : f32
    %86 = vector.broadcast %cst_15 : f32 to vector<8x8x8xf32>
    %87 = arith.mulf %85, %86 : vector<8x8x8xf32>
    %cst_16 = arith.constant -3.40282347E+38 : f32
    %88 = vector.shape_cast %84 : vector<1x8x8xi1> to vector<1x8x8xi1>
    %89 = vector.broadcast %88 : vector<1x8x8xi1> to vector<8x8x8xi1>
    %90 = vector.broadcast %cst_16 : f32 to vector<8x8x8xf32>
    %91 = arith.select %89, %87, %90 : vector<8x8x8xi1>, vector<8x8x8xf32>
    %cst_17 = arith.constant dense<0xFF800000> : vector<8x8xf32>
    %92 = vector.multi_reduction <maximumf>, %91, %cst_17 [2] : vector<8x8x8xf32> to vector<8x8xf32>
    %93 = vector.shape_cast %92 : vector<8x8xf32> to vector<8x8x1xf32>
    %94 = vector.broadcast %93 : vector<8x8x1xf32> to vector<8x8x8xf32>
    %95 = arith.subf %91, %94 : vector<8x8x8xf32>
    %96 = math.exp %95 : vector<8x8x8xf32>
    %cst_18 = arith.constant dense<0.000000e+00> : vector<8x8xf32>
    %97 = vector.multi_reduction <add>, %96, %cst_18 [2] : vector<8x8x8xf32> to vector<8x8xf32>
    %98 = vector.shape_cast %97 : vector<8x8xf32> to vector<8x8x1xf32>
    %99 = tpu.reciprocal %98 {approx = true} : vector<8x8x1xf32> -> vector<8x8x1xf32>
    %100 = vector.broadcast %99 : vector<8x8x1xf32> to vector<8x8x8xf32>
    %101 = arith.mulf %96, %100 : vector<8x8x8xf32>
    "tpu.trace_start"() <{level = 10 : i32, message = "zqk,zkd->zqd"}> : () -> ()
    %cst_19 = arith.constant dense<0.000000e+00> : vector<8x8x8xf32>
    %102 = tpu.matmul %101, %80, %cst_19 {dimension_numbers = #tpu.dot_dimension_numbers<[2], [1], [1], [2], [0, 0, 0, 1, 1, 2], [0], [0]>} : vector<8x8x8xf32>, vector<8x8x8xf32>, vector<8x8x8xf32> -> vector<8x8x8xf32>
    "tpu.trace_stop"() : () -> ()
    %103 = vector.extract_strided_slice %102 {offsets = [0, 0, 0], sizes = [1, 8, 8], strides = [1, 1, 1]} : vector<8x8x8xf32> to vector<1x8x8xf32>
    %104 = vector.shape_cast %103 : vector<1x8x8xf32> to vector<8x8xf32>
    %c0_20 = arith.constant 0 : index
    %c0_21 = arith.constant 0 : index
    %105 = vector.load %arg14[%c0_20, %c0_21] : memref<16x32xf32, #tpu.memory_space<vmem>>, vector<8x8xf32>
    tpu.vector_store %arg14[%c0_20, %c0_21], %104 {strides = array<i32>} : memref<16x32xf32, #tpu.memory_space<vmem>>, vector<8x8xf32>,
    %106 = vector.extract_strided_slice %102 {offsets = [1, 0, 0], sizes = [1, 8, 8], strides = [1, 1, 1]} : vector<8x8x8xf32> to vector<1x8x8xf32>
    %107 = vector.shape_cast %106 : vector<1x8x8xf32> to vector<8x8xf32>
    %c0_22 = arith.constant 0 : index
    %c8 = arith.constant 8 : index
    %108 = vector.load %arg14[%c0_22, %c8] : memref<16x32xf32, #tpu.memory_space<vmem>>, vector<8x8xf32>
    tpu.vector_store %arg14[%c0_22, %c8], %107 {strides = array<i32>} : memref<16x32xf32, #tpu.memory_space<vmem>>, vector<8x8xf32>,
    %109 = vector.extract_strided_slice %102 {offsets = [2, 0, 0], sizes = [1, 8, 8], strides = [1, 1, 1]} : vector<8x8x8xf32> to vector<1x8x8xf32>
    %110 = vector.shape_cast %109 : vector<1x8x8xf32> to vector<8x8xf32>
    %c0_23 = arith.constant 0 : index
    %c16 = arith.constant 16 : index
    %111 = vector.load %arg14[%c0_23, %c16] : memref<16x32xf32, #tpu.memory_space<vmem>>, vector<8x8xf32>
    tpu.vector_store %arg14[%c0_23, %c16], %110 {strides = array<i32>} : memref<16x32xf32, #tpu.memory_space<vmem>>, vector<8x8xf32>,
    %112 = vector.extract_strided_slice %102 {offsets = [3, 0, 0], sizes = [1, 8, 8], strides = [1, 1, 1]} : vector<8x8x8xf32> to vector<1x8x8xf32>
    %113 = vector.shape_cast %112 : vector<1x8x8xf32> to vector<8x8xf32>
    %c0_24 = arith.constant 0 : index
    %c24 = arith.constant 24 : index
    %114 = vector.load %arg14[%c0_24, %c24] : memref<16x32xf32, #tpu.memory_space<vmem>>, vector<8x8xf32>
    tpu.vector_store %arg14[%c0_24, %c24], %113 {strides = array<i32>} : memref<16x32xf32, #tpu.memory_space<vmem>>, vector<8x8xf32>,
    %115 = vector.extract_strided_slice %102 {offsets = [4, 0, 0], sizes = [1, 8, 8], strides = [1, 1, 1]} : vector<8x8x8xf32> to vector<1x8x8xf32>
    %116 = vector.shape_cast %115 : vector<1x8x8xf32> to vector<8x8xf32>
    %c8_25 = arith.constant 8 : index
    %c0_26 = arith.constant 0 : index
    %117 = vector.load %arg14[%c8_25, %c0_26] : memref<16x32xf32, #tpu.memory_space<vmem>>, vector<8x8xf32>
    tpu.vector_store %arg14[%c8_25, %c0_26], %116 {strides = array<i32>} : memref<16x32xf32, #tpu.memory_space<vmem>>, vector<8x8xf32>,
    %118 = vector.extract_strided_slice %102 {offsets = [5, 0, 0], sizes = [1, 8, 8], strides = [1, 1, 1]} : vector<8x8x8xf32> to vector<1x8x8xf32>
    %119 = vector.shape_cast %118 : vector<1x8x8xf32> to vector<8x8xf32>
    %c8_27 = arith.constant 8 : index
    %c8_28 = arith.constant 8 : index
    %120 = vector.load %arg14[%c8_27, %c8_28] : memref<16x32xf32, #tpu.memory_space<vmem>>, vector<8x8xf32>
    tpu.vector_store %arg14[%c8_27, %c8_28], %119 {strides = array<i32>} : memref<16x32xf32, #tpu.memory_space<vmem>>, vector<8x8xf32>,
    %121 = vector.extract_strided_slice %102 {offsets = [6, 0, 0], sizes = [1, 8, 8], strides = [1, 1, 1]} : vector<8x8x8xf32> to vector<1x8x8xf32>
    %122 = vector.shape_cast %121 : vector<1x8x8xf32> to vector<8x8xf32>
    %c8_29 = arith.constant 8 : index
    %c16_30 = arith.constant 16 : index
    %123 = vector.load %arg14[%c8_29, %c16_30] : memref<16x32xf32, #tpu.memory_space<vmem>>, vector<8x8xf32>
    tpu.vector_store %arg14[%c8_29, %c16_30], %122 {strides = array<i32>} : memref<16x32xf32, #tpu.memory_space<vmem>>, vector<8x8xf32>,
    %124 = vector.extract_strided_slice %102 {offsets = [7, 0, 0], sizes = [1, 8, 8], strides = [1, 1, 1]} : vector<8x8x8xf32> to vector<1x8x8xf32>
    %125 = vector.shape_cast %124 : vector<1x8x8xf32> to vector<8x8xf32>
    %c8_31 = arith.constant 8 : index
    %c24_32 = arith.constant 24 : index
    %126 = vector.load %arg14[%c8_31, %c24_32] : memref<16x32xf32, #tpu.memory_space<vmem>>, vector<8x8xf32>
    tpu.vector_store %arg14[%c8_31, %c24_32], %125 {strides = array<i32>} : memref<16x32xf32, #tpu.memory_space<vmem>>, vector<8x8xf32>,
    %c0_33 = arith.constant 0 : index
    %c0_34 = arith.constant 0 : index
    %127 = vector.load %arg14[%c0_33, %c0_34] : memref<16x32xf32, #tpu.memory_space<vmem>>, vector<16x32xf32>
    %c0_35 = arith.constant 0 : index
    %c0_36 = arith.constant 0 : index
    %128 = vector.load %arg5[%c0_35, %c0_36] : memref<32x32xf32, #tpu.memory_space<vmem>>, vector<32x32xf32>
    %cst_37 = arith.constant dense<0.000000e+00> : vector<16x32xf32>
    %129 = tpu.matmul %127, %128, %cst_37 {dimension_numbers = #tpu.dot_dimension_numbers<[1], [0], [0], [1], [0, 0, 1, 1], [], []>} : vector<16x32xf32>, vector<32x32xf32>, vector<16x32xf32> -> vector<16x32xf32>
    %c0_38 = arith.constant 0 : index
    %c0_39 = arith.constant 0 : index
    %130 = vector.load %arg6[%c0_38, %c0_39] : memref<1x32xf32, #tpu.memory_space<vmem>>, vector<1x32xf32>
    %131 = vector.broadcast %130 : vector<1x32xf32> to vector<16x32xf32>
    %132 = arith.addf %129, %131 : vector<16x32xf32>
    %133 = arith.addf %0, %132 : vector<16x32xf32>
    %c0_40 = arith.constant 0 : index
    %c0_41 = arith.constant 0 : index
    %134 = vector.load %arg7[%c0_40, %c0_41] : memref<1x32xf32, #tpu.memory_space<vmem>>, vector<1x32xf32>
    %c0_42 = arith.constant 0 : index
    %c0_43 = arith.constant 0 : index
    %135 = vector.load %arg8[%c0_42, %c0_43] : memref<1x32xf32, #tpu.memory_space<vmem>>, vector<1x32xf32>
    %cst_44 = arith.constant dense<0.000000e+00> : vector<16xf32>
    %136 = vector.multi_reduction <add>, %133, %cst_44 [1] : vector<16x32xf32> to vector<16xf32>
    %137 = vector.shape_cast %136 : vector<16xf32> to vector<16x1xf32>
    %cst_45 = arith.constant 3.200000e+01 : f32
    %138 = vector.broadcast %cst_45 : f32 to vector<16x1xf32>
    %139 = arith.divf %137, %138 : vector<16x1xf32>
    %140 = vector.broadcast %139 : vector<16x1xf32> to vector<16x32xf32>
    %141 = arith.subf %133, %140 : vector<16x32xf32>
    %142 = arith.mulf %141, %141 : vector<16x32xf32>
    %cst_46 = arith.constant dense<0.000000e+00> : vector<16xf32>
    %143 = vector.multi_reduction <add>, %142, %cst_46 [1] : vector<16x32xf32> to vector<16xf32>
    %144 = vector.shape_cast %143 : vector<16xf32> to vector<16x1xf32>
    %cst_47 = arith.constant 3.200000e+01 : f32
    %145 = vector.broadcast %cst_47 : f32 to vector<16x1xf32>
    %146 = arith.divf %144, %145 : vector<16x1xf32>
    %147 = vector.broadcast %139 : vector<16x1xf32> to vector<16x32xf32>
    %148 = arith.subf %133, %147 : vector<16x32xf32>
    %cst_48 = arith.constant 9.99999974E-6 : f32
    %149 = vector.broadcast %cst_48 : f32 to vector<16x1xf32>
    %150 = arith.addf %146, %149 : vector<16x1xf32>
    %151 = math.rsqrt %150 : vector<16x1xf32>
    %152 = vector.broadcast %151 : vector<16x1xf32> to vector<16x32xf32>
    %153 = arith.mulf %148, %152 : vector<16x32xf32>
    %154 = vector.broadcast %134 : vector<1x32xf32> to vector<16x32xf32>
    %155 = arith.mulf %153, %154 : vector<16x32xf32>
    %156 = vector.broadcast %135 : vector<1x32xf32> to vector<16x32xf32>
    %157 = arith.addf %155, %156 : vector<16x32xf32>
    %c0_49 = arith.constant 0 : index
    %c0_50 = arith.constant 0 : index
    %158 = vector.load %arg9[%c0_49, %c0_50] : memref<32x128xf32, #tpu.memory_space<vmem>>, vector<32x128xf32>
    %cst_51 = arith.constant dense<0.000000e+00> : vector<16x128xf32>
    %159 = tpu.matmul %157, %158, %cst_51 {dimension_numbers = #tpu.dot_dimension_numbers<[1], [0], [0], [1], [0, 0, 1, 1], [], []>} : vector<16x32xf32>, vector<32x128xf32>, vector<16x128xf32> -> vector<16x128xf32>
    %c0_52 = arith.constant 0 : index
    %c0_53 = arith.constant 0 : index
    %160 = vector.load %arg10[%c0_52, %c0_53] : memref<1x128xf32, #tpu.memory_space<vmem>>, vector<1x128xf32>
    %161 = vector.broadcast %160 : vector<1x128xf32> to vector<16x128xf32>
    %162 = arith.addf %159, %161 : vector<16x128xf32>
    %cst_54 = arith.constant 5.000000e-01 : f32
    %163 = vector.broadcast %cst_54 : f32 to vector<16x128xf32>
    %164 = arith.mulf %163, %162 : vector<16x128xf32>
    %cst_55 = arith.constant 0.636619746 : f32
    %165 = math.sqrt %cst_55 : f32
    %166 = arith.mulf %162, %162 : vector<16x128xf32>
    %167 = arith.mulf %162, %166 : vector<16x128xf32>
    %cst_56 = arith.constant 4.471500e-02 : f32
    %168 = vector.broadcast %cst_56 : f32 to vector<16x128xf32>
    %169 = arith.mulf %168, %167 : vector<16x128xf32>
    %170 = arith.addf %162, %169 : vector<16x128xf32>
    %171 = vector.broadcast %165 : f32 to vector<16x128xf32>
    %172 = arith.mulf %171, %170 : vector<16x128xf32>
    %173 = math.tanh %172 : vector<16x128xf32>
    %cst_57 = arith.constant 1.000000e+00 : f32
    %174 = vector.broadcast %cst_57 : f32 to vector<16x128xf32>
    %175 = arith.addf %174, %173 : vector<16x128xf32>
    %176 = arith.mulf %164, %175 : vector<16x128xf32>
    %c0_58 = arith.constant 0 : index
    %c0_59 = arith.constant 0 : index
    %177 = vector.load %arg11[%c0_58, %c0_59] : memref<128x32xf32, #tpu.memory_space<vmem>>, vector<128x32xf32>
    %cst_60 = arith.constant dense<0.000000e+00> : vector<16x32xf32>
    %178 = tpu.matmul %176, %177, %cst_60 {dimension_numbers = #tpu.dot_dimension_numbers<[1], [0], [0], [1], [0, 0, 1, 1], [], []>} : vector<16x128xf32>, vector<128x32xf32>, vector<16x32xf32> -> vector<16x32xf32>
    %c0_61 = arith.constant 0 : index
    %c0_62 = arith.constant 0 : index
    %179 = vector.load %arg12[%c0_61, %c0_62] : memref<1x32xf32, #tpu.memory_space<vmem>>, vector<1x32xf32>
    %180 = vector.broadcast %179 : vector<1x32xf32> to vector<16x32xf32>
    %181 = arith.addf %178, %180 : vector<16x32xf32>
    %182 = arith.addf %133, %181 : vector<16x32xf32>
    %c0_63 = arith.constant 0 : index
    %c0_64 = arith.constant 0 : index
    %183 = vector.load %arg13[%c0_63, %c0_64] : memref<16x32xf32, #tpu.memory_space<vmem>>, vector<16x32xf32>
    tpu.vector_store %arg13[%c0_63, %c0_64], %182 {strides = array<i32>} : memref<16x32xf32, #tpu.memory_space<vmem>>, vector<16x32xf32>,
    return
  }
}

</mosaic_0001>

<llo_original>
// kernel: tpu_custom_call.1
$region0: #{tpu_custom_call.1}
  #allocation0 [shape = 'u32[]', space=smem, size = 0x4, offset = 0x4, fixed_abs, tag = 'smem constant byte address 0x4 - core index']
  #allocation1 [shape = 'u32[144,128]{1,0:T(1,128)}', space=vmem, size = 0x12000, scoped, tag = 'internal scratch']
  #allocation2 [shape = 'f32[16,32]{1,0:T(8,128)}', space=vmem, size = 0x2000, scoped, tag = 'scratch operand']
  %s0 = inlined_call_operand.vmem [shape: f32[16,32], index: 0, kind: input, shape index: {}]
  %s1 = inlined_call_operand.vmem [shape: f32[1,32], index: 1, kind: input, shape index: {}]
  %s2 = inlined_call_operand.vmem [shape: f32[1,32], index: 2, kind: input, shape index: {}]
  %s3 = inlined_call_operand.vmem [shape: f32[32,128], index: 3, kind: input, shape index: {}]
  %s4 = inlined_call_operand.vmem [shape: f32[1,128], index: 4, kind: input, shape index: {}]
  %s5 = inlined_call_operand.vmem [shape: f32[32,32], index: 5, kind: input, shape index: {}]
  %s6 = inlined_call_operand.vmem [shape: f32[1,32], index: 6, kind: input, shape index: {}]
  %s7 = inlined_call_operand.vmem [shape: f32[1,32], index: 7, kind: input, shape index: {}]
  %s8 = inlined_call_operand.vmem [shape: f32[1,32], index: 8, kind: input, shape index: {}]
  %s9 = inlined_call_operand.vmem [shape: f32[32,128], index: 9, kind: input, shape index: {}]
  %s10 = inlined_call_operand.vmem [shape: f32[1,128], index: 10, kind: input, shape index: {}]
  %s11 = inlined_call_operand.vmem [shape: f32[128,32], index: 11, kind: input, shape index: {}]
  %s12 = inlined_call_operand.vmem [shape: f32[1,32], index: 12, kind: input, shape index: {}]
  %s13 = inlined_call_operand.hbm [shape: f32[16,32], index: 13, kind: output, shape index: {}]
  %s14 = sld [smem:[#allocation0]]
  $region62: #{tpu_custom_call.1} parent=0
    _
  %s16 = ssub.s32 1, %s14
  %s17 = scalar_select 0, %s16, %s14
  $region1: #{tpu_custom_call.1} parent=0
    #allocation3 [shape = 'u8[8192]{0}', space=vmem, size = 0x2000, scoped, tag = 'output window, operand 0, single buffered']
    #allocation4 [shape = 's32[1]{0}', space=sflag, size = 0x4, scoped, tag = 'scoped memory for tpu_custom_call.1']
    %18 = vsyncpa [#allocation4], 0
    // Predicated region
    $region2: #{tpu_custom_call.1} parent=1 // pred_check
      _
    $region3: #{tpu_custom_call.1} parent=1 // pred_check_branch
      %20 = sbr.rel (0) target = $region5
    $region4: #{tpu_custom_call.1} parent=1 // pred_region
      _
    $region5: #{tpu_custom_call.1} parent=1 // pred_fallthru
      _
    // Predicated region
    $region6: #{tpu_custom_call.1} parent=1 // pred_check
      _
    $region7: #{tpu_custom_call.1} parent=1 // pred_check_branch
      %22 = sbr.rel (0) target = $region9
    $region8: #{tpu_custom_call.1} parent=1 // pred_region
      _
    $region9: #{tpu_custom_call.1} parent=1 // pred_fallthru
      _
    // Predicated region
    $region10: #{tpu_custom_call.1} parent=1 // pred_check
      _
    $region11: #{tpu_custom_call.1} parent=1 // pred_check_branch
      %24 = sbr.rel (0) target = $region13
    $region12: #{tpu_custom_call.1} parent=1 // pred_region
      _
    $region13: #{tpu_custom_call.1} parent=1 // pred_fallthru
      _
    // Predicated region
    $region14: #{tpu_custom_call.1} parent=1 // pred_check
      _
    $region15: #{tpu_custom_call.1} parent=1 // pred_check_branch
      %26 = sbr.rel (0) target = $region17
    $region16: #{tpu_custom_call.1} parent=1 // pred_region
      _
    $region17: #{tpu_custom_call.1} parent=1 // pred_fallthru
      _
    // Predicated region
    $region18: #{tpu_custom_call.1} parent=1 // pred_check
      _
    $region19: #{tpu_custom_call.1} parent=1 // pred_check_branch
      %28 = sbr.rel (0) target = $region21
    $region20: #{tpu_custom_call.1} parent=1 // pred_region
      _
    $region21: #{tpu_custom_call.1} parent=1 // pred_fallthru
      _
    // Predicated region
    $region22: #{tpu_custom_call.1} parent=1 // pred_check
      _
    $region23: #{tpu_custom_call.1} parent=1 // pred_check_branch
      %30 = sbr.rel (0) target = $region25
    $region24: #{tpu_custom_call.1} parent=1 // pred_region
      _
    $region25: #{tpu_custom_call.1} parent=1 // pred_fallthru
      _
    // Predicated region
    $region26: #{tpu_custom_call.1} parent=1 // pred_check
      _
    $region27: #{tpu_custom_call.1} parent=1 // pred_check_branch
      %32 = sbr.rel (0) target = $region29
    $region28: #{tpu_custom_call.1} parent=1 // pred_region
      _
    $region29: #{tpu_custom_call.1} parent=1 // pred_fallthru
      _
    // Predicated region
    $region30: #{tpu_custom_call.1} parent=1 // pred_check
      _
    $region31: #{tpu_custom_call.1} parent=1 // pred_check_branch
      %34 = sbr.rel (0) target = $region33
    $region32: #{tpu_custom_call.1} parent=1 // pred_region
      _
    $region33: #{tpu_custom_call.1} parent=1 // pred_fallthru
      _
    // Predicated region
    $region34: #{tpu_custom_call.1} parent=1 // pred_check
      _
    $region35: #{tpu_custom_call.1} parent=1 // pred_check_branch
      %36 = sbr.rel (0) target = $region37
    $region36: #{tpu_custom_call.1} parent=1 // pred_region
      _
    $region37: #{tpu_custom_call.1} parent=1 // pred_fallthru
      _
    // Predicated region
    $region38: #{tpu_custom_call.1} parent=1 // pred_check
      _
    $region39: #{tpu_custom_call.1} parent=1 // pred_check_branch
      %38 = sbr.rel (0) target = $region41
    $region40: #{tpu_custom_call.1} parent=1 // pred_region
      _
    $region41: #{tpu_custom_call.1} parent=1 // pred_fallthru
      _
    // Predicated region
    $region42: #{tpu_custom_call.1} parent=1 // pred_check
      _
    $region43: #{tpu_custom_call.1} parent=1 // pred_check_branch
      %40 = sbr.rel (0) target = $region45
    $region44: #{tpu_custom_call.1} parent=1 // pred_region
      _
    $region45: #{tpu_custom_call.1} parent=1 // pred_fallthru
      _
    // Predicated region
    $region46: #{tpu_custom_call.1} parent=1 // pred_check
      _
    $region47: #{tpu_custom_call.1} parent=1 // pred_check_branch
      %42 = sbr.rel (0) target = $region49
    $region48: #{tpu_custom_call.1} parent=1 // pred_region
      _
    $region49: #{tpu_custom_call.1} parent=1 // pred_fallthru
      _
    // Predicated region
    $region50: #{tpu_custom_call.1} parent=1 // pred_check
      _
    $region51: #{tpu_custom_call.1} parent=1 // pred_check_branch
      %44 = sbr.rel (0) target = $region53
    $region52: #{tpu_custom_call.1} parent=1 // pred_region
      _
    $region53: #{tpu_custom_call.1} parent=1 // pred_fallthru
      _
    %v45 = vld [vmem:[%s0] sm:$0xff]
    %v46 = vld [vmem:[%s0 + $0x8] sm:$0xff]
    %v47 = vld [vmem:[%s1] sm:$0x1]
    %v48 = vld [vmem:[%s2] sm:$0x1]
    %vm49 = vcmask 261120
    %v50 = vsel %vm49, %v45, 0.0
    %51 = vadd.xlane.f32.xlu0 %v50
    %v52 = vpop.xlane.xlu0 %51
    %v53 = vsel %vm49, %v46, 0.0
    %54 = vadd.xlane.f32.xlu0 %v53
    %v55 = vpop.xlane.xlu0 %54
    %v56 = vrcp.pop 32.0
    %v57 = vmul.f32 %v52, %v56
    %v58 = vmul.f32 %v55, %v56
    %v59 = vsub.f32 %v45, %v57
    %v60 = vsub.f32 %v46, %v58
    %v61 = vmul.f32 %v59, %v59
    %v62 = vmul.f32 %v60, %v60
    %v63 = vsel %vm49, %v61, 0.0
    %64 = vadd.xlane.f32.xlu0 %v63
    %v65 = vpop.xlane.xlu0 %64
    %v66 = vsel %vm49, %v62, 0.0
    %67 = vadd.xlane.f32.xlu0 %v66
    %v68 = vpop.xlane.xlu0 %67
    %v69 = vmul.f32 %v65, %v56
    %v70 = vmul.f32 %v68, %v56
    %v71 = vadd.f32 %v69, 1e-05
    %v72 = vadd.f32 %v70, 1e-05
    %v73 = vrsqrt.pop %v71
    %v74 = vrsqrt.pop %v72
    %v75 = vmul.f32 %v59, %v73
    %v76 = vmul.f32 %v60, %v74
    %v78 = vlaneseq
    %v79 = vshrl.u32 %v78, 7
    %v80 = vsub.s32 0, %v79
    %v81 = vrot.slane %v47, %v80
    %v83 = vmul.f32 %v75, %v81
    %v84 = vmul.f32 %v76, %v81
    %v86 = vlaneseq
    %v87 = vshrl.u32 %v86, 7
    %v88 = vsub.s32 0, %v87
    %v89 = vrot.slane %v48, %v88
    %v91 = vadd.f32 %v83, %v89
    %v92 = vadd.f32 %v84, %v89
    %v93 = vld [vmem:[%s3] sm:$0xff]
    %v94 = vld [vmem:[%s3 + $0x8] sm:$0xff]
    %v95 = vld [vmem:[%s3 + $0x10] sm:$0xff]
    %v96 = vld [vmem:[%s3 + $0x18] sm:$0xff]
    %v97 = vld [vmem:[%s4] sm:$0x1]
    %v99 = vlaneseq
    %v100 = vshrl.u32 %v99, 7
    %v101 = vsub.s32 0, %v100
    %v102 = vrot.slane %v97, %v101
    %v105 = vsel %vm49, %v91, 0
    %v108 = vsel %vm49, %v92, 0
    %110 = vmatprep.subr.mxu0 0.0
    %111 = vmatpush1.msra.mxu0 0.0
    %112 = vmatprep.subr.mxu0 0.0
    %113 = vmatpush1.msra.mxu0 0.0
    %114 = vmatprep.subr.mxu0 0.0
    %115 = vmatpush1.msra.mxu0 0.0
    %116 = vmatprep.subr.mxu0 0.0
    %117 = vmatpush1.msra.mxu0 0.0
    %118 = vmatprep.subr.mxu0 0.0
    %119 = vmatpush1.msra.mxu0 0.0
    %120 = vmatprep.subr.mxu0 0.0
    %121 = vmatpush1.msra.mxu0 0.0
    %122 = vmatprep.subr.mxu0 0.0
    %123 = vmatpush1.msra.mxu0 0.0
    %124 = vmatprep.subr.mxu0 0.0
    %125 = vmatpush1.msra.mxu0 0.0
    %126 = vmatprep.subr.mxu0 0.0
    %127 = vmatpush1.msra.mxu0 0.0
    %128 = vmatprep.subr.mxu0 0.0
    %129 = vmatpush1.msra.mxu0 0.0
    %130 = vmatprep.subr.mxu0 0.0
    %131 = vmatpush1.msra.mxu0 0.0
    %132 = vmatprep.subr.mxu0 0.0
    %133 = vmatpush1.msra.mxu0 0.0
    %134 = vmatprep.subr.mxu0 0.0
    %135 = vmatpush1.msra.mxu0 %v96
    %136 = vmatprep.subr.mxu0 0.0
    %137 = vmatpush1.msra.mxu0 %v95
    %138 = vmatprep.subr.mxu0 0.0
    %139 = vmatpush1.msra.mxu0 %v94
    %140 = vmatprep.subr.mxu0 0.0
    %141 = vmatpush1.msra.mxu0 %v93
    %142 = vmatprep.subr.mxu0 0.0
    %143 = vmatpush2.msra.mxu0 0.0
    %144 = vmatprep.subr.mxu0 0.0
    %145 = vmatpush2.msra.mxu0 0.0
    %146 = vmatprep.subr.mxu0 0.0
    %147 = vmatpush2.msra.mxu0 0.0
    %148 = vmatprep.subr.mxu0 0.0
    %149 = vmatpush2.msra.mxu0 0.0
    %150 = vmatprep.subr.mxu0 0.0
    %151 = vmatpush2.msra.mxu0 0.0
    %152 = vmatprep.subr.mxu0 0.0
    %153 = vmatpush2.msra.mxu0 0.0
    %154 = vmatprep.subr.mxu0 0.0
    %155 = vmatpush2.msra.mxu0 0.0
    %156 = vmatprep.subr.mxu0 0.0
    %157 = vmatpush2.msra.mxu0 0.0
    %158 = vmatprep.subr.mxu0 0.0
    %159 = vmatpush2.msra.mxu0 0.0
    %160 = vmatprep.subr.mxu0 0.0
    %161 = vmatpush2.msra.mxu0 0.0
    %162 = vmatprep.subr.mxu0 0.0
    %163 = vmatpush2.msra.mxu0 0.0
    %164 = vmatprep.subr.mxu0 0.0
    %165 = vmatpush2.msra.mxu0 0.0
    %166 = vmatprep.subr.mxu0 0.0
    %167 = vmatpush2.msra.mxu0 0.0
    %168 = vmatprep.subr.mxu0 0.0
    %169 = vmatpush2.msra.mxu0 0.0
    %170 = vmatprep.subr.mxu0 0.0
    %171 = vmatpush2.msra.mxu0 0.0
    %172 = vmatprep.subr.mxu0 0.0
    %173 = vmatpush2.msra.mxu0 0.0
    %174 = vmatprep.mubr.f32.mxu0 0.0
    %175 = vmatmul.mubr.f32.gmra.mxu0 %v105
    %v176 = vpop.f32.mrf.mxu0
    %v177 = vadd.f32 %v102, %v176
    %v178 = vpop.f32.mrf.mxu0
    %179 = vmatprep.mubr.f32.mxu0 0.0
    %180 = vmatmul.mubr.f32.gmra.mxu0 %v108
    %v181 = vpop.f32.mrf.mxu0
    %v182 = vadd.f32 %v102, %v181
    %v183 = vpop.f32.mrf.mxu0
    %184 = vdwg.mxu0
    %186 = vrot.lane.b32.xlu0 %v177, 120
    %v187 = vpop.permute.xlu0 %186
    %188 = vrot.lane.b32.xlu0 %v177, 112
    %v189 = vpop.permute.xlu0 %188
    %190 = vrot.lane.b32.xlu0 %v177, 104
    %v191 = vpop.permute.xlu0 %190
    %193 = vrot.lane.b32.xlu0 %v182, 120
    %v194 = vpop.permute.xlu0 %193
    %195 = vrot.lane.b32.xlu0 %v182, 112
    %v196 = vpop.permute.xlu0 %195
    %197 = vrot.lane.b32.xlu0 %v182, 104
    %v198 = vpop.permute.xlu0 %197
    %v199 = vlaneseq
    %v200 = vshrl.u32 %v199, 7
    %v201 = vlaneseq
    %v202 = vand.u32 %v201, 127
    %vm203 = vcmp.le.s32.totalorder %v202, %v200
    %204 = vrot.lane.b32.xlu0 %v177, 96
    %v205 = vpop.permute.xlu0 %204
    %vm206 = vcmask 64512
    %v207 = vsel %vm206, %v177, 0
    %v209 = vsel %vm206, %v205, 0
    %211 = vmatprep.subr.mxu0 0.0
    %212 = vmatpush1.xpose.msra.mxu0 0.0
    %213 = vmatprep.subr.mxu0 0.0
    %214 = vmatpush1.xpose.msra.mxu0 0.0
    %215 = vmatprep.subr.mxu0 0.0
    %216 = vmatpush1.xpose.msra.mxu0 0.0
    %217 = vmatprep.subr.mxu0 0.0
    %218 = vmatpush1.xpose.msra.mxu0 0.0
    %219 = vmatprep.subr.mxu0 0.0
    %220 = vmatpush1.xpose.msra.mxu0 0.0
    %221 = vmatprep.subr.mxu0 0.0
    %222 = vmatpush1.xpose.msra.mxu0 0.0
    %223 = vmatprep.subr.mxu0 0.0
    %224 = vmatpush1.xpose.msra.mxu0 0.0
    %225 = vmatprep.subr.mxu0 0.0
    %226 = vmatpush1.xpose.msra.mxu0 0.0
    %227 = vmatprep.subr.mxu0 0.0
    %228 = vmatpush1.xpose.msra.mxu0 0.0
    %229 = vmatprep.subr.mxu0 0.0
    %230 = vmatpush1.xpose.msra.mxu0 0.0
    %231 = vmatprep.subr.mxu0 0.0
    %232 = vmatpush1.xpose.msra.mxu0 0.0
    %233 = vmatprep.subr.mxu0 0.0
    %234 = vmatpush1.xpose.msra.mxu0 0.0
    %235 = vmatprep.subr.mxu0 0.0
    %236 = vmatpush1.xpose.msra.mxu0 0.0
    %237 = vmatprep.subr.mxu0 0.0
    %238 = vmatpush1.xpose.msra.mxu0 0.0
    %239 = vmatprep.subr.mxu0 0.0
    %240 = vmatpush1.xpose.msra.mxu0 0.0
    %241 = vmatprep.subr.mxu0 0.0
    %242 = vmatpush1.xpose.msra.mxu0 %v209
    %243 = vmatprep.subr.mxu0 0.0
    %244 = vmatpush2.xpose.msra.mxu0 0.0
    %245 = vmatprep.subr.mxu0 0.0
    %246 = vmatpush2.xpose.msra.mxu0 0.0
    %247 = vmatprep.subr.mxu0 0.0
    %248 = vmatpush2.xpose.msra.mxu0 0.0
    %249 = vmatprep.subr.mxu0 0.0
    %250 = vmatpush2.xpose.msra.mxu0 0.0
    %251 = vmatprep.subr.mxu0 0.0
    %252 = vmatpush2.xpose.msra.mxu0 0.0
    %253 = vmatprep.subr.mxu0 0.0
    %254 = vmatpush2.xpose.msra.mxu0 0.0
    %255 = vmatprep.subr.mxu0 0.0
    %256 = vmatpush2.xpose.msra.mxu0 0.0
    %257 = vmatprep.subr.mxu0 0.0
    %258 = vmatpush2.xpose.msra.mxu0 0.0
    %259 = vmatprep.subr.mxu0 0.0
    %260 = vmatpush2.xpose.msra.mxu0 0.0
    %261 = vmatprep.subr.mxu0 0.0
    %262 = vmatpush2.xpose.msra.mxu0 0.0
    %263 = vmatprep.subr.mxu0 0.0
    %264 = vmatpush2.xpose.msra.mxu0 0.0
    %265 = vmatprep.subr.mxu0 0.0
    %266 = vmatpush2.xpose.msra.mxu0 0.0
    %267 = vmatprep.subr.mxu0 0.0
    %268 = vmatpush2.xpose.msra.mxu0 0.0
    %269 = vmatprep.subr.mxu0 0.0
    %270 = vmatpush2.xpose.msra.mxu0 0.0
    %271 = vmatprep.subr.mxu0 0.0
    %272 = vmatpush2.xpose.msra.mxu0 0.0
    %273 = vmatprep.subr.mxu0 0.0
    %274 = vmatpush2.xpose.msra.mxu0 0.0
    %275 = vmatprep.mubr.f32.mxu0 0.0
    %276 = vmatmul.mubr.f32.gmra.mxu0 %v207
    %v277 = vpop.f32.mrf.mxu0
    %v278 = vadd.f32 0.0, %v277
    %v279 = vpop.f32.mrf.mxu0
    %280 = vdwg.mxu0
    %281 = vrot.lane.b32.xlu0 %v187, 96
    %v282 = vpop.permute.xlu0 %281
    %v283 = vsel %vm206, %v187, 0
    %v285 = vsel %vm206, %v282, 0
    %287 = vmatprep.subr.mxu0 0.0
    %288 = vmatpush1.xpose.msra.mxu0 0.0
    %289 = vmatprep.subr.mxu0 0.0
    %290 = vmatpush1.xpose.msra.mxu0 0.0
    %291 = vmatprep.subr.mxu0 0.0
    %292 = vmatpush1.xpose.msra.mxu0 0.0
    %293 = vmatprep.subr.mxu0 0.0
    %294 = vmatpush1.xpose.msra.mxu0 0.0
    %295 = vmatprep.subr.mxu0 0.0
    %296 = vmatpush1.xpose.msra.mxu0 0.0
    %297 = vmatprep.subr.mxu0 0.0
    %298 = vmatpush1.xpose.msra.mxu0 0.0
    %299 = vmatprep.subr.mxu0 0.0
    %300 = vmatpush1.xpose.msra.mxu0 0.0
    %301 = vmatprep.subr.mxu0 0.0
    %302 = vmatpush1.xpose.msra.mxu0 0.0
    %303 = vmatprep.subr.mxu0 0.0
    %304 = vmatpush1.xpose.msra.mxu0 0.0
    %305 = vmatprep.subr.mxu0 0.0
    %306 = vmatpush1.xpose.msra.mxu0 0.0
    %307 = vmatprep.subr.mxu0 0.0
    %308 = vmatpush1.xpose.msra.mxu0 0.0
    %309 = vmatprep.subr.mxu0 0.0
    %310 = vmatpush1.xpose.msra.mxu0 0.0
    %311 = vmatprep.subr.mxu0 0.0
    %312 = vmatpush1.xpose.msra.mxu0 0.0
    %313 = vmatprep.subr.mxu0 0.0
    %314 = vmatpush1.xpose.msra.mxu0 0.0
    %315 = vmatprep.subr.mxu0 0.0
    %316 = vmatpush1.xpose.msra.mxu0 0.0
    %317 = vmatprep.subr.mxu0 0.0
    %318 = vmatpush1.xpose.msra.mxu0 %v285
    %319 = vmatprep.subr.mxu0 0.0
    %320 = vmatpush2.xpose.msra.mxu0 0.0
    %321 = vmatprep.subr.mxu0 0.0
    %322 = vmatpush2.xpose.msra.mxu0 0.0
    %323 = vmatprep.subr.mxu0 0.0
    %324 = vmatpush2.xpose.msra.mxu0 0.0
    %325 = vmatprep.subr.mxu0 0.0
    %326 = vmatpush2.xpose.msra.mxu0 0.0
    %327 = vmatprep.subr.mxu0 0.0
    %328 = vmatpush2.xpose.msra.mxu0 0.0
    %329 = vmatprep.subr.mxu0 0.0
    %330 = vmatpush2.xpose.msra.mxu0 0.0
    %331 = vmatprep.subr.mxu0 0.0
    %332 = vmatpush2.xpose.msra.mxu0 0.0
    %333 = vmatprep.subr.mxu0 0.0
    %334 = vmatpush2.xpose.msra.mxu0 0.0
    %335 = vmatprep.subr.mxu0 0.0
    %336 = vmatpush2.xpose.msra.mxu0 0.0
    %337 = vmatprep.subr.mxu0 0.0
    %338 = vmatpush2.xpose.msra.mxu0 0.0
    %339 = vmatprep.subr.mxu0 0.0
    %340 = vmatpush2.xpose.msra.mxu0 0.0
    %341 = vmatprep.subr.mxu0 0.0
    %342 = vmatpush2.xpose.msra.mxu0 0.0
    %343 = vmatprep.subr.mxu0 0.0
    %344 = vmatpush2.xpose.msra.mxu0 0.0
    %345 = vmatprep.subr.mxu0 0.0
    %346 = vmatpush2.xpose.msra.mxu0 0.0
    %347 = vmatprep.subr.mxu0 0.0
    %348 = vmatpush2.xpose.msra.mxu0 0.0
    %349 = vmatprep.subr.mxu0 0.0
    %350 = vmatpush2.xpose.msra.mxu0 0.0
    %351 = vmatprep.mubr.f32.mxu0 0.0
    %352 = vmatmul.mubr.f32.gmra.mxu0 %v283
    %v353 = vpop.f32.mrf.mxu0
    %v354 = vadd.f32 0.0, %v353
    %v355 = vpop.f32.mrf.mxu0
    %356 = vdwg.mxu0
    %357 = vrot.lane.b32.xlu0 %v189, 96
    %v358 = vpop.permute.xlu0 %357
    %v359 = vsel %vm206, %v189, 0
    %v361 = vsel %vm206, %v358, 0
    %363 = vmatprep.subr.mxu0 0.0
    %364 = vmatpush1.xpose.msra.mxu0 0.0
    %365 = vmatprep.subr.mxu0 0.0
    %366 = vmatpush1.xpose.msra.mxu0 0.0
    %367 = vmatprep.subr.mxu0 0.0
    %368 = vmatpush1.xpose.msra.mxu0 0.0
    %369 = vmatprep.subr.mxu0 0.0
    %370 = vmatpush1.xpose.msra.mxu0 0.0
    %371 = vmatprep.subr.mxu0 0.0
    %372 = vmatpush1.xpose.msra.mxu0 0.0
    %373 = vmatprep.subr.mxu0 0.0
    %374 = vmatpush1.xpose.msra.mxu0 0.0
    %375 = vmatprep.subr.mxu0 0.0
    %376 = vmatpush1.xpose.msra.mxu0 0.0
    %377 = vmatprep.subr.mxu0 0.0
    %378 = vmatpush1.xpose.msra.mxu0 0.0
    %379 = vmatprep.subr.mxu0 0.0
    %380 = vmatpush1.xpose.msra.mxu0 0.0
    %381 = vmatprep.subr.mxu0 0.0
    %382 = vmatpush1.xpose.msra.mxu0 0.0
    %383 = vmatprep.subr.mxu0 0.0
    %384 = vmatpush1.xpose.msra.mxu0 0.0
    %385 = vmatprep.subr.mxu0 0.0
    %386 = vmatpush1.xpose.msra.mxu0 0.0
    %387 = vmatprep.subr.mxu0 0.0
    %388 = vmatpush1.xpose.msra.mxu0 0.0
    %389 = vmatprep.subr.mxu0 0.0
    %390 = vmatpush1.xpose.msra.mxu0 0.0
    %391 = vmatprep.subr.mxu0 0.0
    %392 = vmatpush1.xpose.msra.mxu0 0.0
    %393 = vmatprep.subr.mxu0 0.0
    %394 = vmatpush1.xpose.msra.mxu0 %v361
    %395 = vmatprep.subr.mxu0 0.0
    %396 = vmatpush2.xpose.msra.mxu0 0.0
    %397 = vmatprep.subr.mxu0 0.0
    %398 = vmatpush2.xpose.msra.mxu0 0.0
    %399 = vmatprep.subr.mxu0 0.0
    %400 = vmatpush2.xpose.msra.mxu0 0.0
    %401 = vmatprep.subr.mxu0 0.0
    %402 = vmatpush2.xpose.msra.mxu0 0.0
    %403 = vmatprep.subr.mxu0 0.0
    %404 = vmatpush2.xpose.msra.mxu0 0.0
    %405 = vmatprep.subr.mxu0 0.0
    %406 = vmatpush2.xpose.msra.mxu0 0.0
    %407 = vmatprep.subr.mxu0 0.0
    %408 = vmatpush2.xpose.msra.mxu0 0.0
    %409 = vmatprep.subr.mxu0 0.0
    %410 = vmatpush2.xpose.msra.mxu0 0.0
    %411 = vmatprep.subr.mxu0 0.0
    %412 = vmatpush2.xpose.msra.mxu0 0.0
    %413 = vmatprep.subr.mxu0 0.0
    %414 = vmatpush2.xpose.msra.mxu0 0.0
    %415 = vmatprep.subr.mxu0 0.0
    %416 = vmatpush2.xpose.msra.mxu0 0.0
    %417 = vmatprep.subr.mxu0 0.0
    %418 = vmatpush2.xpose.msra.mxu0 0.0
    %419 = vmatprep.subr.mxu0 0.0
    %420 = vmatpush2.xpose.msra.mxu0 0.0
    %421 = vmatprep.subr.mxu0 0.0
    %422 = vmatpush2.xpose.msra.mxu0 0.0
    %423 = vmatprep.subr.mxu0 0.0
    %424 = vmatpush2.xpose.msra.mxu0 0.0
    %425 = vmatprep.subr.mxu0 0.0
    %426 = vmatpush2.xpose.msra.mxu0 0.0
    %427 = vmatprep.mubr.f32.mxu0 0.0
    %428 = vmatmul.mubr.f32.gmra.mxu0 %v359
    %v429 = vpop.f32.mrf.mxu0
    %v430 = vadd.f32 0.0, %v429
    %v431 = vpop.f32.mrf.mxu0
    %432 = vdwg.mxu0
    %433 = vrot.lane.b32.xlu0 %v191, 96
    %v434 = vpop.permute.xlu0 %433
    %v435 = vsel %vm206, %v191, 0
    %v437 = vsel %vm206, %v434, 0
    %439 = vmatprep.subr.mxu0 0.0
    %440 = vmatpush1.xpose.msra.mxu0 0.0
    %441 = vmatprep.subr.mxu0 0.0
    %442 = vmatpush1.xpose.msra.mxu0 0.0
    %443 = vmatprep.subr.mxu0 0.0
    %444 = vmatpush1.xpose.msra.mxu0 0.0
    %445 = vmatprep.subr.mxu0 0.0
    %446 = vmatpush1.xpose.msra.mxu0 0.0
    %447 = vmatprep.subr.mxu0 0.0
    %448 = vmatpush1.xpose.msra.mxu0 0.0
    %449 = vmatprep.subr.mxu0 0.0
    %450 = vmatpush1.xpose.msra.mxu0 0.0
    %451 = vmatprep.subr.mxu0 0.0
    %452 = vmatpush1.xpose.msra.mxu0 0.0
    %453 = vmatprep.subr.mxu0 0.0
    %454 = vmatpush1.xpose.msra.mxu0 0.0
    %455 = vmatprep.subr.mxu0 0.0
    %456 = vmatpush1.xpose.msra.mxu0 0.0
    %457 = vmatprep.subr.mxu0 0.0
    %458 = vmatpush1.xpose.msra.mxu0 0.0
    %459 = vmatprep.subr.mxu0 0.0
    %460 = vmatpush1.xpose.msra.mxu0 0.0
    %461 = vmatprep.subr.mxu0 0.0
    %462 = vmatpush1.xpose.msra.mxu0 0.0
    %463 = vmatprep.subr.mxu0 0.0
    %464 = vmatpush1.xpose.msra.mxu0 0.0
    %465 = vmatprep.subr.mxu0 0.0
    %466 = vmatpush1.xpose.msra.mxu0 0.0
    %467 = vmatprep.subr.mxu0 0.0
    %468 = vmatpush1.xpose.msra.mxu0 0.0
    %469 = vmatprep.subr.mxu0 0.0
    %470 = vmatpush1.xpose.msra.mxu0 %v437
    %471 = vmatprep.subr.mxu0 0.0
    %472 = vmatpush2.xpose.msra.mxu0 0.0
    %473 = vmatprep.subr.mxu0 0.0
    %474 = vmatpush2.xpose.msra.mxu0 0.0
    %475 = vmatprep.subr.mxu0 0.0
    %476 = vmatpush2.xpose.msra.mxu0 0.0
    %477 = vmatprep.subr.mxu0 0.0
    %478 = vmatpush2.xpose.msra.mxu0 0.0
    %479 = vmatprep.subr.mxu0 0.0
    %480 = vmatpush2.xpose.msra.mxu0 0.0
    %481 = vmatprep.subr.mxu0 0.0
    %482 = vmatpush2.xpose.msra.mxu0 0.0
    %483 = vmatprep.subr.mxu0 0.0
    %484 = vmatpush2.xpose.msra.mxu0 0.0
    %485 = vmatprep.subr.mxu0 0.0
    %486 = vmatpush2.xpose.msra.mxu0 0.0
    %487 = vmatprep.subr.mxu0 0.0
    %488 = vmatpush2.xpose.msra.mxu0 0.0
    %489 = vmatprep.subr.mxu0 0.0
    %490 = vmatpush2.xpose.msra.mxu0 0.0
    %491 = vmatprep.subr.mxu0 0.0
    %492 = vmatpush2.xpose.msra.mxu0 0.0
    %493 = vmatprep.subr.mxu0 0.0
    %494 = vmatpush2.xpose.msra.mxu0 0.0
    %495 = vmatprep.subr.mxu0 0.0
    %496 = vmatpush2.xpose.msra.mxu0 0.0
    %497 = vmatprep.subr.mxu0 0.0
    %498 = vmatpush2.xpose.msra.mxu0 0.0
    %499 = vmatprep.subr.mxu0 0.0
    %500 = vmatpush2.xpose.msra.mxu0 0.0
    %501 = vmatprep.subr.mxu0 0.0
    %502 = vmatpush2.xpose.msra.mxu0 0.0
    %503 = vmatprep.mubr.f32.mxu0 0.0
    %504 = vmatmul.mubr.f32.gmra.mxu0 %v435
    %v505 = vpop.f32.mrf.mxu0
    %v506 = vadd.f32 0.0, %v505
    %v507 = vpop.f32.mrf.mxu0
    %508 = vdwg.mxu0
    %509 = vrot.lane.b32.xlu0 %v182, 96
    %v510 = vpop.permute.xlu0 %509
    %v511 = vsel %vm206, %v182, 0
    %v513 = vsel %vm206, %v510, 0
    %515 = vmatprep.subr.mxu0 0.0
    %516 = vmatpush1.xpose.msra.mxu0 0.0
    %517 = vmatprep.subr.mxu0 0.0
    %518 = vmatpush1.xpose.msra.mxu0 0.0
    %519 = vmatprep.subr.mxu0 0.0
    %520 = vmatpush1.xpose.msra.mxu0 0.0
    %521 = vmatprep.subr.mxu0 0.0
    %522 = vmatpush1.xpose.msra.mxu0 0.0
    %523 = vmatprep.subr.mxu0 0.0
    %524 = vmatpush1.xpose.msra.mxu0 0.0
    %525 = vmatprep.subr.mxu0 0.0
    %526 = vmatpush1.xpose.msra.mxu0 0.0
    %527 = vmatprep.subr.mxu0 0.0
    %528 = vmatpush1.xpose.msra.mxu0 0.0
    %529 = vmatprep.subr.mxu0 0.0
    %530 = vmatpush1.xpose.msra.mxu0 0.0
    %531 = vmatprep.subr.mxu0 0.0
    %532 = vmatpush1.xpose.msra.mxu0 0.0
    %533 = vmatprep.subr.mxu0 0.0
    %534 = vmatpush1.xpose.msra.mxu0 0.0
    %535 = vmatprep.subr.mxu0 0.0
    %536 = vmatpush1.xpose.msra.mxu0 0.0
    %537 = vmatprep.subr.mxu0 0.0
    %538 = vmatpush1.xpose.msra.mxu0 0.0
    %539 = vmatprep.subr.mxu0 0.0
    %540 = vmatpush1.xpose.msra.mxu0 0.0
    %541 = vmatprep.subr.mxu0 0.0
    %542 = vmatpush1.xpose.msra.mxu0 0.0
    %543 = vmatprep.subr.mxu0 0.0
    %544 = vmatpush1.xpose.msra.mxu0 0.0
    %545 = vmatprep.subr.mxu0 0.0
    %546 = vmatpush1.xpose.msra.mxu0 %v513
    %547 = vmatprep.subr.mxu0 0.0
    %548 = vmatpush2.xpose.msra.mxu0 0.0
    %549 = vmatprep.subr.mxu0 0.0
    %550 = vmatpush2.xpose.msra.mxu0 0.0
    %551 = vmatprep.subr.mxu0 0.0
    %552 = vmatpush2.xpose.msra.mxu0 0.0
    %553 = vmatprep.subr.mxu0 0.0
    %554 = vmatpush2.xpose.msra.mxu0 0.0
    %555 = vmatprep.subr.mxu0 0.0
    %556 = vmatpush2.xpose.msra.mxu0 0.0
    %557 = vmatprep.subr.mxu0 0.0
    %558 = vmatpush2.xpose.msra.mxu0 0.0
    %559 = vmatprep.subr.mxu0 0.0
    %560 = vmatpush2.xpose.msra.mxu0 0.0
    %561 = vmatprep.subr.mxu0 0.0
    %562 = vmatpush2.xpose.msra.mxu0 0.0
    %563 = vmatprep.subr.mxu0 0.0
    %564 = vmatpush2.xpose.msra.mxu0 0.0
    %565 = vmatprep.subr.mxu0 0.0
    %566 = vmatpush2.xpose.msra.mxu0 0.0
    %567 = vmatprep.subr.mxu0 0.0
    %568 = vmatpush2.xpose.msra.mxu0 0.0
    %569 = vmatprep.subr.mxu0 0.0
    %570 = vmatpush2.xpose.msra.mxu0 0.0
    %571 = vmatprep.subr.mxu0 0.0
    %572 = vmatpush2.xpose.msra.mxu0 0.0
    %573 = vmatprep.subr.mxu0 0.0
    %574 = vmatpush2.xpose.msra.mxu0 0.0
    %575 = vmatprep.subr.mxu0 0.0
    %576 = vmatpush2.xpose.msra.mxu0 0.0
    %577 = vmatprep.subr.mxu0 0.0
    %578 = vmatpush2.xpose.msra.mxu0 0.0
    %579 = vmatprep.mubr.f32.mxu0 0.0
    %580 = vmatmul.mubr.f32.gmra.mxu0 %v511
    %v581 = vpop.f32.mrf.mxu0
    %v582 = vadd.f32 0.0, %v581
    %v583 = vpop.f32.mrf.mxu0
    %584 = vdwg.mxu0
    %585 = vrot.lane.b32.xlu0 %v194, 96
    %v586 = vpop.permute.xlu0 %585
    %v587 = vsel %vm206, %v194, 0
    %v589 = vsel %vm206, %v586, 0
    %591 = vmatprep.subr.mxu0 0.0
    %592 = vmatpush1.xpose.msra.mxu0 0.0
    %593 = vmatprep.subr.mxu0 0.0
    %594 = vmatpush1.xpose.msra.mxu0 0.0
    %595 = vmatprep.subr.mxu0 0.0
    %596 = vmatpush1.xpose.msra.mxu0 0.0
    %597 = vmatprep.subr.mxu0 0.0
    %598 = vmatpush1.xpose.msra.mxu0 0.0
    %599 = vmatprep.subr.mxu0 0.0
    %600 = vmatpush1.xpose.msra.mxu0 0.0
    %601 = vmatprep.subr.mxu0 0.0
    %602 = vmatpush1.xpose.msra.mxu0 0.0
    %603 = vmatprep.subr.mxu0 0.0
    %604 = vmatpush1.xpose.msra.mxu0 0.0
    %605 = vmatprep.subr.mxu0 0.0
    %606 = vmatpush1.xpose.msra.mxu0 0.0
    %607 = vmatprep.subr.mxu0 0.0
    %608 = vmatpush1.xpose.msra.mxu0 0.0
    %609 = vmatprep.subr.mxu0 0.0
    %610 = vmatpush1.xpose.msra.mxu0 0.0
    %611 = vmatprep.subr.mxu0 0.0
    %612 = vmatpush1.xpose.msra.mxu0 0.0
    %613 = vmatprep.subr.mxu0 0.0
    %614 = vmatpush1.xpose.msra.mxu0 0.0
    %615 = vmatprep.subr.mxu0 0.0
    %616 = vmatpush1.xpose.msra.mxu0 0.0
    %617 = vmatprep.subr.mxu0 0.0
    %618 = vmatpush1.xpose.msra.mxu0 0.0
    %619 = vmatprep.subr.mxu0 0.0
    %620 = vmatpush1.xpose.msra.mxu0 0.0
    %621 = vmatprep.subr.mxu0 0.0
    %622 = vmatpush1.xpose.msra.mxu0 %v589
    %623 = vmatprep.subr.mxu0 0.0
    %624 = vmatpush2.xpose.msra.mxu0 0.0
    %625 = vmatprep.subr.mxu0 0.0
    %626 = vmatpush2.xpose.msra.mxu0 0.0
    %627 = vmatprep.subr.mxu0 0.0
    %628 = vmatpush2.xpose.msra.mxu0 0.0
    %629 = vmatprep.subr.mxu0 0.0
    %630 = vmatpush2.xpose.msra.mxu0 0.0
    %631 = vmatprep.subr.mxu0 0.0
    %632 = vmatpush2.xpose.msra.mxu0 0.0
    %633 = vmatprep.subr.mxu0 0.0
    %634 = vmatpush2.xpose.msra.mxu0 0.0
    %635 = vmatprep.subr.mxu0 0.0
    %636 = vmatpush2.xpose.msra.mxu0 0.0
    %637 = vmatprep.subr.mxu0 0.0
    %638 = vmatpush2.xpose.msra.mxu0 0.0
    %639 = vmatprep.subr.mxu0 0.0
    %640 = vmatpush2.xpose.msra.mxu0 0.0
    %641 = vmatprep.subr.mxu0 0.0
    %642 = vmatpush2.xpose.msra.mxu0 0.0
    %643 = vmatprep.subr.mxu0 0.0
    %644 = vmatpush2.xpose.msra.mxu0 0.0
    %645 = vmatprep.subr.mxu0 0.0
    %646 = vmatpush2.xpose.msra.mxu0 0.0
    %647 = vmatprep.subr.mxu0 0.0
    %648 = vmatpush2.xpose.msra.mxu0 0.0
    %649 = vmatprep.subr.mxu0 0.0
    %650 = vmatpush2.xpose.msra.mxu0 0.0
    %651 = vmatprep.subr.mxu0 0.0
    %652 = vmatpush2.xpose.msra.mxu0 0.0
    %653 = vmatprep.subr.mxu0 0.0
    %654 = vmatpush2.xpose.msra.mxu0 0.0
    %655 = vmatprep.mubr.f32.mxu0 0.0
    %656 = vmatmul.mubr.f32.gmra.mxu0 %v587
    %v657 = vpop.f32.mrf.mxu0
    %v658 = vadd.f32 0.0, %v657
    %v659 = vpop.f32.mrf.mxu0
    %660 = vdwg.mxu0
    %661 = vrot.lane.b32.xlu0 %v196, 96
    %v662 = vpop.permute.xlu0 %661
    %v663 = vsel %vm206, %v196, 0
    %v665 = vsel %vm206, %v662, 0
    %667 = vmatprep.subr.mxu0 0.0
    %668 = vmatpush1.xpose.msra.mxu0 0.0
    %669 = vmatprep.subr.mxu0 0.0
    %670 = vmatpush1.xpose.msra.mxu0 0.0
    %671 = vmatprep.subr.mxu0 0.0
    %672 = vmatpush1.xpose.msra.mxu0 0.0
    %673 = vmatprep.subr.mxu0 0.0
    %674 = vmatpush1.xpose.msra.mxu0 0.0
    %675 = vmatprep.subr.mxu0 0.0
    %676 = vmatpush1.xpose.msra.mxu0 0.0
    %677 = vmatprep.subr.mxu0 0.0
    %678 = vmatpush1.xpose.msra.mxu0 0.0
    %679 = vmatprep.subr.mxu0 0.0
    %680 = vmatpush1.xpose.msra.mxu0 0.0
    %681 = vmatprep.subr.mxu0 0.0
    %682 = vmatpush1.xpose.msra.mxu0 0.0
    %683 = vmatprep.subr.mxu0 0.0
    %684 = vmatpush1.xpose.msra.mxu0 0.0
    %685 = vmatprep.subr.mxu0 0.0
    %686 = vmatpush1.xpose.msra.mxu0 0.0
    %687 = vmatprep.subr.mxu0 0.0
    %688 = vmatpush1.xpose.msra.mxu0 0.0
    %689 = vmatprep.subr.mxu0 0.0
    %690 = vmatpush1.xpose.msra.mxu0 0.0
    %691 = vmatprep.subr.mxu0 0.0
    %692 = vmatpush1.xpose.msra.mxu0 0.0
    %693 = vmatprep.subr.mxu0 0.0
    %694 = vmatpush1.xpose.msra.mxu0 0.0
    %695 = vmatprep.subr.mxu0 0.0
    %696 = vmatpush1.xpose.msra.mxu0 0.0
    %697 = vmatprep.subr.mxu0 0.0
    %698 = vmatpush1.xpose.msra.mxu0 %v665
    %699 = vmatprep.subr.mxu0 0.0
    %700 = vmatpush2.xpose.msra.mxu0 0.0
    %701 = vmatprep.subr.mxu0 0.0
    %702 = vmatpush2.xpose.msra.mxu0 0.0
    %703 = vmatprep.subr.mxu0 0.0
    %704 = vmatpush2.xpose.msra.mxu0 0.0
    %705 = vmatprep.subr.mxu0 0.0
    %706 = vmatpush2.xpose.msra.mxu0 0.0
    %707 = vmatprep.subr.mxu0 0.0
    %708 = vmatpush2.xpose.msra.mxu0 0.0
    %709 = vmatprep.subr.mxu0 0.0
    %710 = vmatpush2.xpose.msra.mxu0 0.0
    %711 = vmatprep.subr.mxu0 0.0
    %712 = vmatpush2.xpose.msra.mxu0 0.0
    %713 = vmatprep.subr.mxu0 0.0
    %714 = vmatpush2.xpose.msra.mxu0 0.0
    %715 = vmatprep.subr.mxu0 0.0
    %716 = vmatpush2.xpose.msra.mxu0 0.0
    %717 = vmatprep.subr.mxu0 0.0
    %718 = vmatpush2.xpose.msra.mxu0 0.0
    %719 = vmatprep.subr.mxu0 0.0
    %720 = vmatpush2.xpose.msra.mxu0 0.0
    %721 = vmatprep.subr.mxu0 0.0
    %722 = vmatpush2.xpose.msra.mxu0 0.0
    %723 = vmatprep.subr.mxu0 0.0
    %724 = vmatpush2.xpose.msra.mxu0 0.0
    %725 = vmatprep.subr.mxu0 0.0
    %726 = vmatpush2.xpose.msra.mxu0 0.0
    %727 = vmatprep.subr.mxu0 0.0
    %728 = vmatpush2.xpose.msra.mxu0 0.0
    %729 = vmatprep.subr.mxu0 0.0
    %730 = vmatpush2.xpose.msra.mxu0 0.0
    %731 = vmatprep.mubr.f32.mxu0 0.0
    %732 = vmatmul.mubr.f32.gmra.mxu0 %v663
    %v733 = vpop.f32.mrf.mxu0
    %v734 = vadd.f32 0.0, %v733
    %v735 = vpop.f32.mrf.mxu0
    %736 = vdwg.mxu0
    %737 = vrot.lane.b32.xlu0 %v198, 96
    %v738 = vpop.permute.xlu0 %737
    %v739 = vsel %vm206, %v198, 0
    %v741 = vsel %vm206, %v738, 0
    %743 = vmatprep.subr.mxu0 0.0
    %744 = vmatpush1.xpose.msra.mxu0 0.0
    %745 = vmatprep.subr.mxu0 0.0
    %746 = vmatpush1.xpose.msra.mxu0 0.0
    %747 = vmatprep.subr.mxu0 0.0
    %748 = vmatpush1.xpose.msra.mxu0 0.0
    %749 = vmatprep.subr.mxu0 0.0
    %750 = vmatpush1.xpose.msra.mxu0 0.0
    %751 = vmatprep.subr.mxu0 0.0
    %752 = vmatpush1.xpose.msra.mxu0 0.0
    %753 = vmatprep.subr.mxu0 0.0
    %754 = vmatpush1.xpose.msra.mxu0 0.0
    %755 = vmatprep.subr.mxu0 0.0
    %756 = vmatpush1.xpose.msra.mxu0 0.0
    %757 = vmatprep.subr.mxu0 0.0
    %758 = vmatpush1.xpose.msra.mxu0 0.0
    %759 = vmatprep.subr.mxu0 0.0
    %760 = vmatpush1.xpose.msra.mxu0 0.0
    %761 = vmatprep.subr.mxu0 0.0
    %762 = vmatpush1.xpose.msra.mxu0 0.0
    %763 = vmatprep.subr.mxu0 0.0
    %764 = vmatpush1.xpose.msra.mxu0 0.0
    %765 = vmatprep.subr.mxu0 0.0
    %766 = vmatpush1.xpose.msra.mxu0 0.0
    %767 = vmatprep.subr.mxu0 0.0
    %768 = vmatpush1.xpose.msra.mxu0 0.0
    %769 = vmatprep.subr.mxu0 0.0
    %770 = vmatpush1.xpose.msra.mxu0 0.0
    %771 = vmatprep.subr.mxu0 0.0
    %772 = vmatpush1.xpose.msra.mxu0 0.0
    %773 = vmatprep.subr.mxu0 0.0
    %774 = vmatpush1.xpose.msra.mxu0 %v741
    %775 = vmatprep.subr.mxu0 0.0
    %776 = vmatpush2.xpose.msra.mxu0 0.0
    %777 = vmatprep.subr.mxu0 0.0
    %778 = vmatpush2.xpose.msra.mxu0 0.0
    %779 = vmatprep.subr.mxu0 0.0
    %780 = vmatpush2.xpose.msra.mxu0 0.0
    %781 = vmatprep.subr.mxu0 0.0
    %782 = vmatpush2.xpose.msra.mxu0 0.0
    %783 = vmatprep.subr.mxu0 0.0
    %784 = vmatpush2.xpose.msra.mxu0 0.0
    %785 = vmatprep.subr.mxu0 0.0
    %786 = vmatpush2.xpose.msra.mxu0 0.0
    %787 = vmatprep.subr.mxu0 0.0
    %788 = vmatpush2.xpose.msra.mxu0 0.0
    %789 = vmatprep.subr.mxu0 0.0
    %790 = vmatpush2.xpose.msra.mxu0 0.0
    %791 = vmatprep.subr.mxu0 0.0
    %792 = vmatpush2.xpose.msra.mxu0 0.0
    %793 = vmatprep.subr.mxu0 0.0
    %794 = vmatpush2.xpose.msra.mxu0 0.0
    %795 = vmatprep.subr.mxu0 0.0
    %796 = vmatpush2.xpose.msra.mxu0 0.0
    %797 = vmatprep.subr.mxu0 0.0
    %798 = vmatpush2.xpose.msra.mxu0 0.0
    %799 = vmatprep.subr.mxu0 0.0
    %800 = vmatpush2.xpose.msra.mxu0 0.0
    %801 = vmatprep.subr.mxu0 0.0
    %802 = vmatpush2.xpose.msra.mxu0 0.0
    %803 = vmatprep.subr.mxu0 0.0
    %804 = vmatpush2.xpose.msra.mxu0 0.0
    %805 = vmatprep.subr.mxu0 0.0
    %806 = vmatpush2.xpose.msra.mxu0 0.0
    %807 = vmatprep.mubr.f32.mxu0 0.0
    %808 = vmatmul.mubr.f32.gmra.mxu0 %v739
    %v809 = vpop.f32.mrf.mxu0
    %v810 = vadd.f32 0.0, %v809
    %v811 = vpop.f32.mrf.mxu0
    %812 = vdwg.mxu0
    %v813 = vmul.f32 %v278, 0.35355338
    %v814 = vmul.f32 %v354, 0.35355338
    %v815 = vmul.f32 %v430, 0.35355338
    %v816 = vmul.f32 %v506, 0.35355338
    %v817 = vmul.f32 %v582, 0.35355338
    %v818 = vmul.f32 %v658, 0.35355338
    %v819 = vmul.f32 %v734, 0.35355338
    %v820 = vmul.f32 %v810, 0.35355338
    %v821 = vsel %vm203, 1, 0
    %vm822 = vcmp.eq.s32.totalorder %v821, 1
    %v823 = vsel %vm822, %v813, -3.4028235e+38
    %v824 = vsel %vm822, %v814, -3.4028235e+38
    %v825 = vsel %vm822, %v815, -3.4028235e+38
    %v826 = vsel %vm822, %v816, -3.4028235e+38
    %v827 = vsel %vm822, %v817, -3.4028235e+38
    %v828 = vsel %vm822, %v818, -3.4028235e+38
    %v829 = vsel %vm822, %v819, -3.4028235e+38
    %v830 = vsel %vm822, %v820, -3.4028235e+38
    %v831 = vsel %vm206, %v823, -inf
    %832 = vmax.xlane.f32.xlu0 %v831
    %v833 = vpop.xlane.xlu0 %832
    %v834 = vsel %vm206, %v824, -inf
    %835 = vmax.xlane.f32.xlu0 %v834
    %v836 = vpop.xlane.xlu0 %835
    %v837 = vsel %vm206, %v825, -inf
    %838 = vmax.xlane.f32.xlu0 %v837
    %v839 = vpop.xlane.xlu0 %838
    %v840 = vsel %vm206, %v826, -inf
    %841 = vmax.xlane.f32.xlu0 %v840
    %v842 = vpop.xlane.xlu0 %841
    %v843 = vsel %vm206, %v827, -inf
    %844 = vmax.xlane.f32.xlu0 %v843
    %v845 = vpop.xlane.xlu0 %844
    %v846 = vsel %vm206, %v828, -inf
    %847 = vmax.xlane.f32.xlu0 %v846
    %v848 = vpop.xlane.xlu0 %847
    %v849 = vsel %vm206, %v829, -inf
    %850 = vmax.xlane.f32.xlu0 %v849
    %v851 = vpop.xlane.xlu0 %850
    %v852 = vsel %vm206, %v830, -inf
    %853 = vmax.xlane.f32.xlu0 %v852
    %v854 = vpop.xlane.xlu0 %853
    %v855 = vsub.f32 %v823, %v833
    %v856 = vsub.f32 %v824, %v836
    %v857 = vsub.f32 %v825, %v839
    %v858 = vsub.f32 %v826, %v842
    %v859 = vsub.f32 %v827, %v845
    %v860 = vsub.f32 %v828, %v848
    %v861 = vsub.f32 %v829, %v851
    %v862 = vsub.f32 %v830, %v854
    %v863 = vmul.f32 %v855, 1.442695
    %v864 = vpow.pop %v863
    %v865 = vmul.f32 %v856, 1.442695
    %v866 = vpow.pop %v865
    %v867 = vmul.f32 %v857, 1.442695
    %v868 = vpow.pop %v867
    %v869 = vmul.f32 %v858, 1.442695
    %v870 = vpow.pop %v869
    %v871 = vmul.f32 %v859, 1.442695
    %v872 = vpow.pop %v871
    %v873 = vmul.f32 %v860, 1.442695
    %v874 = vpow.pop %v873
    %v875 = vmul.f32 %v861, 1.442695
    %v876 = vpow.pop %v875
    %v877 = vmul.f32 %v862, 1.442695
    %v878 = vpow.pop %v877
    %v879 = vsel %vm206, %v864, 0.0
    %880 = vadd.xlane.f32.xlu0 %v879
    %v881 = vpop.xlane.xlu0 %880
    %v882 = vsel %vm206, %v866, 0.0
    %883 = vadd.xlane.f32.xlu0 %v882
    %v884 = vpop.xlane.xlu0 %883
    %v885 = vsel %vm206, %v868, 0.0
    %886 = vadd.xlane.f32.xlu0 %v885
    %v887 = vpop.xlane.xlu0 %886
    %v888 = vsel %vm206, %v870, 0.0
    %889 = vadd.xlane.f32.xlu0 %v888
    %v890 = vpop.xlane.xlu0 %889
    %v891 = vsel %vm206, %v872, 0.0
    %892 = vadd.xlane.f32.xlu0 %v891
    %v893 = vpop.xlane.xlu0 %892
    %v894 = vsel %vm206, %v874, 0.0
    %895 = vadd.xlane.f32.xlu0 %v894
    %v896 = vpop.xlane.xlu0 %895
    %v897 = vsel %vm206, %v876, 0.0
    %898 = vadd.xlane.f32.xlu0 %v897
    %v899 = vpop.xlane.xlu0 %898
    %v900 = vsel %vm206, %v878, 0.0
    %901 = vadd.xlane.f32.xlu0 %v900
    %v902 = vpop.xlane.xlu0 %901
    %v903 = vrcp.pop %v881
    %v904 = vrcp.pop %v884
    %v905 = vrcp.pop %v887
    %v906 = vrcp.pop %v890
    %v907 = vrcp.pop %v893
    %v908 = vrcp.pop %v896
    %v909 = vrcp.pop %v899
    %v910 = vrcp.pop %v902
    %v911 = vmul.f32 %v864, %v903
    %v912 = vmul.f32 %v866, %v904
    %v913 = vmul.f32 %v868, %v905
    %v914 = vmul.f32 %v870, %v906
    %v915 = vmul.f32 %v872, %v907
    %v916 = vmul.f32 %v874, %v908
    %v917 = vmul.f32 %v876, %v909
    %v918 = vmul.f32 %v878, %v910
    %919 = vrot.lane.b32.xlu0 %v177, 64
    %v920 = vpop.permute.xlu0 %919
    %v923 = vsel %vm206, %v911, 0
    %925 = vmatprep.subr.mxu0 0.0
    %926 = vmatpush1.msra.mxu0 0.0
    %927 = vmatprep.subr.mxu0 0.0
    %928 = vmatpush1.msra.mxu0 0.0
    %929 = vmatprep.subr.mxu0 0.0
    %930 = vmatpush1.msra.mxu0 0.0
    %931 = vmatprep.subr.mxu0 0.0
    %932 = vmatpush1.msra.mxu0 0.0
    %933 = vmatprep.subr.mxu0 0.0
    %934 = vmatpush1.msra.mxu0 0.0
    %935 = vmatprep.subr.mxu0 0.0
    %936 = vmatpush1.msra.mxu0 0.0
    %937 = vmatprep.subr.mxu0 0.0
    %938 = vmatpush1.msra.mxu0 0.0
    %939 = vmatprep.subr.mxu0 0.0
    %940 = vmatpush1.msra.mxu0 0.0
    %941 = vmatprep.subr.mxu0 0.0
    %942 = vmatpush1.msra.mxu0 0.0
    %943 = vmatprep.subr.mxu0 0.0
    %944 = vmatpush1.msra.mxu0 0.0
    %945 = vmatprep.subr.mxu0 0.0
    %946 = vmatpush1.msra.mxu0 0.0
    %947 = vmatprep.subr.mxu0 0.0
    %948 = vmatpush1.msra.mxu0 0.0
    %949 = vmatprep.subr.mxu0 0.0
    %950 = vmatpush1.msra.mxu0 0.0
    %951 = vmatprep.subr.mxu0 0.0
    %952 = vmatpush1.msra.mxu0 0.0
    %953 = vmatprep.subr.mxu0 0.0
    %954 = vmatpush1.msra.mxu0 0.0
    %955 = vmatprep.subr.mxu0 0.0
    %956 = vmatpush1.msra.mxu0 %v920
    %957 = vmatprep.subr.mxu0 0.0
    %958 = vmatpush2.msra.mxu0 0.0
    %959 = vmatprep.subr.mxu0 0.0
    %960 = vmatpush2.msra.mxu0 0.0
    %961 = vmatprep.subr.mxu0 0.0
    %962 = vmatpush2.msra.mxu0 0.0
    %963 = vmatprep.subr.mxu0 0.0
    %964 = vmatpush2.msra.mxu0 0.0
    %965 = vmatprep.subr.mxu0 0.0
    %966 = vmatpush2.msra.mxu0 0.0
    %967 = vmatprep.subr.mxu0 0.0
    %968 = vmatpush2.msra.mxu0 0.0
    %969 = vmatprep.subr.mxu0 0.0
    %970 = vmatpush2.msra.mxu0 0.0
    %971 = vmatprep.subr.mxu0 0.0
    %972 = vmatpush2.msra.mxu0 0.0
    %973 = vmatprep.subr.mxu0 0.0
    %974 = vmatpush2.msra.mxu0 0.0
    %975 = vmatprep.subr.mxu0 0.0
    %976 = vmatpush2.msra.mxu0 0.0
    %977 = vmatprep.subr.mxu0 0.0
    %978 = vmatpush2.msra.mxu0 0.0
    %979 = vmatprep.subr.mxu0 0.0
    %980 = vmatpush2.msra.mxu0 0.0
    %981 = vmatprep.subr.mxu0 0.0
    %982 = vmatpush2.msra.mxu0 0.0
    %983 = vmatprep.subr.mxu0 0.0
    %984 = vmatpush2.msra.mxu0 0.0
    %985 = vmatprep.subr.mxu0 0.0
    %986 = vmatpush2.msra.mxu0 0.0
    %987 = vmatprep.subr.mxu0 0.0
    %988 = vmatpush2.msra.mxu0 0.0
    %989 = vmatprep.mubr.f32.mxu0 0.0
    %990 = vmatmul.mubr.f32.gmra.mxu0 %v923
    %v991 = vpop.f32.mrf.mxu0
    %v992 = vadd.f32 0.0, %v991
    %v993 = vpop.f32.mrf.mxu0
    %994 = vdwg.mxu0
    %995 = vrot.lane.b32.xlu0 %v187, 64
    %v996 = vpop.permute.xlu0 %995
    %v999 = vsel %vm206, %v912, 0
    %1001 = vmatprep.subr.mxu0 0.0
    %1002 = vmatpush1.msra.mxu0 0.0
    %1003 = vmatprep.subr.mxu0 0.0
    %1004 = vmatpush1.msra.mxu0 0.0
    %1005 = vmatprep.subr.mxu0 0.0
    %1006 = vmatpush1.msra.mxu0 0.0
    %1007 = vmatprep.subr.mxu0 0.0
    %1008 = vmatpush1.msra.mxu0 0.0
    %1009 = vmatprep.subr.mxu0 0.0
    %1010 = vmatpush1.msra.mxu0 0.0
    %1011 = vmatprep.subr.mxu0 0.0
    %1012 = vmatpush1.msra.mxu0 0.0
    %1013 = vmatprep.subr.mxu0 0.0
    %1014 = vmatpush1.msra.mxu0 0.0
    %1015 = vmatprep.subr.mxu0 0.0
    %1016 = vmatpush1.msra.mxu0 0.0
    %1017 = vmatprep.subr.mxu0 0.0
    %1018 = vmatpush1.msra.mxu0 0.0
    %1019 = vmatprep.subr.mxu0 0.0
    %1020 = vmatpush1.msra.mxu0 0.0
    %1021 = vmatprep.subr.mxu0 0.0
    %1022 = vmatpush1.msra.mxu0 0.0
    %1023 = vmatprep.subr.mxu0 0.0
    %1024 = vmatpush1.msra.mxu0 0.0
    %1025 = vmatprep.subr.mxu0 0.0
    %1026 = vmatpush1.msra.mxu0 0.0
    %1027 = vmatprep.subr.mxu0 0.0
    %1028 = vmatpush1.msra.mxu0 0.0
    %1029 = vmatprep.subr.mxu0 0.0
    %1030 = vmatpush1.msra.mxu0 0.0
    %1031 = vmatprep.subr.mxu0 0.0
    %1032 = vmatpush1.msra.mxu0 %v996
    %1033 = vmatprep.subr.mxu0 0.0
    %1034 = vmatpush2.msra.mxu0 0.0
    %1035 = vmatprep.subr.mxu0 0.0
    %1036 = vmatpush2.msra.mxu0 0.0
    %1037 = vmatprep.subr.mxu0 0.0
    %1038 = vmatpush2.msra.mxu0 0.0
    %1039 = vmatprep.subr.mxu0 0.0
    %1040 = vmatpush2.msra.mxu0 0.0
    %1041 = vmatprep.subr.mxu0 0.0
    %1042 = vmatpush2.msra.mxu0 0.0
    %1043 = vmatprep.subr.mxu0 0.0
    %1044 = vmatpush2.msra.mxu0 0.0
    %1045 = vmatprep.subr.mxu0 0.0
    %1046 = vmatpush2.msra.mxu0 0.0
    %1047 = vmatprep.subr.mxu0 0.0
    %1048 = vmatpush2.msra.mxu0 0.0
    %1049 = vmatprep.subr.mxu0 0.0
    %1050 = vmatpush2.msra.mxu0 0.0
    %1051 = vmatprep.subr.mxu0 0.0
    %1052 = vmatpush2.msra.mxu0 0.0
    %1053 = vmatprep.subr.mxu0 0.0
    %1054 = vmatpush2.msra.mxu0 0.0
    %1055 = vmatprep.subr.mxu0 0.0
    %1056 = vmatpush2.msra.mxu0 0.0
    %1057 = vmatprep.subr.mxu0 0.0
    %1058 = vmatpush2.msra.mxu0 0.0
    %1059 = vmatprep.subr.mxu0 0.0
    %1060 = vmatpush2.msra.mxu0 0.0
    %1061 = vmatprep.subr.mxu0 0.0
    %1062 = vmatpush2.msra.mxu0 0.0
    %1063 = vmatprep.subr.mxu0 0.0
    %1064 = vmatpush2.msra.mxu0 0.0
    %1065 = vmatprep.mubr.f32.mxu0 0.0
    %1066 = vmatmul.mubr.f32.gmra.mxu0 %v999
    %v1067 = vpop.f32.mrf.mxu0
    %v1068 = vadd.f32 0.0, %v1067
    %v1069 = vpop.f32.mrf.mxu0
    %1070 = vdwg.mxu0
    %1071 = vrot.lane.b32.xlu0 %v189, 64
    %v1072 = vpop.permute.xlu0 %1071
    %v1075 = vsel %vm206, %v913, 0
    %1077 = vmatprep.subr.mxu0 0.0
    %1078 = vmatpush1.msra.mxu0 0.0
    %1079 = vmatprep.subr.mxu0 0.0
    %1080 = vmatpush1.msra.mxu0 0.0
    %1081 = vmatprep.subr.mxu0 0.0
    %1082 = vmatpush1.msra.mxu0 0.0
    %1083 = vmatprep.subr.mxu0 0.0
    %1084 = vmatpush1.msra.mxu0 0.0
    %1085 = vmatprep.subr.mxu0 0.0
    %1086 = vmatpush1.msra.mxu0 0.0
    %1087 = vmatprep.subr.mxu0 0.0
    %1088 = vmatpush1.msra.mxu0 0.0
    %1089 = vmatprep.subr.mxu0 0.0
    %1090 = vmatpush1.msra.mxu0 0.0
    %1091 = vmatprep.subr.mxu0 0.0
    %1092 = vmatpush1.msra.mxu0 0.0
    %1093 = vmatprep.subr.mxu0 0.0
    %1094 = vmatpush1.msra.mxu0 0.0
    %1095 = vmatprep.subr.mxu0 0.0
    %1096 = vmatpush1.msra.mxu0 0.0
    %1097 = vmatprep.subr.mxu0 0.0
    %1098 = vmatpush1.msra.mxu0 0.0
    %1099 = vmatprep.subr.mxu0 0.0
    %1100 = vmatpush1.msra.mxu0 0.0
    %1101 = vmatprep.subr.mxu0 0.0
    %1102 = vmatpush1.msra.mxu0 0.0
    %1103 = vmatprep.subr.mxu0 0.0
    %1104 = vmatpush1.msra.mxu0 0.0
    %1105 = vmatprep.subr.mxu0 0.0
    %1106 = vmatpush1.msra.mxu0 0.0
    %1107 = vmatprep.subr.mxu0 0.0
    %1108 = vmatpush1.msra.mxu0 %v1072
    %1109 = vmatprep.subr.mxu0 0.0
    %1110 = vmatpush2.msra.mxu0 0.0
    %1111 = vmatprep.subr.mxu0 0.0
    %1112 = vmatpush2.msra.mxu0 0.0
    %1113 = vmatprep.subr.mxu0 0.0
    %1114 = vmatpush2.msra.mxu0 0.0
    %1115 = vmatprep.subr.mxu0 0.0
    %1116 = vmatpush2.msra.mxu0 0.0
    %1117 = vmatprep.subr.mxu0 0.0
    %1118 = vmatpush2.msra.mxu0 0.0
    %1119 = vmatprep.subr.mxu0 0.0
    %1120 = vmatpush2.msra.mxu0 0.0
    %1121 = vmatprep.subr.mxu0 0.0
    %1122 = vmatpush2.msra.mxu0 0.0
    %1123 = vmatprep.subr.mxu0 0.0
    %1124 = vmatpush2.msra.mxu0 0.0
    %1125 = vmatprep.subr.mxu0 0.0
    %1126 = vmatpush2.msra.mxu0 0.0
    %1127 = vmatprep.subr.mxu0 0.0
    %1128 = vmatpush2.msra.mxu0 0.0
    %1129 = vmatprep.subr.mxu0 0.0
    %1130 = vmatpush2.msra.mxu0 0.0
    %1131 = vmatprep.subr.mxu0 0.0
    %1132 = vmatpush2.msra.mxu0 0.0
    %1133 = vmatprep.subr.mxu0 0.0
    %1134 = vmatpush2.msra.mxu0 0.0
    %1135 = vmatprep.subr.mxu0 0.0
    %1136 = vmatpush2.msra.mxu0 0.0
    %1137 = vmatprep.subr.mxu0 0.0
    %1138 = vmatpush2.msra.mxu0 0.0
    %1139 = vmatprep.subr.mxu0 0.0
    %1140 = vmatpush2.msra.mxu0 0.0
    %1141 = vmatprep.mubr.f32.mxu0 0.0
    %1142 = vmatmul.mubr.f32.gmra.mxu0 %v1075
    %v1143 = vpop.f32.mrf.mxu0
    %v1144 = vadd.f32 0.0, %v1143
    %v1145 = vpop.f32.mrf.mxu0
    %1146 = vdwg.mxu0
    %1147 = vrot.lane.b32.xlu0 %v191, 64
    %v1148 = vpop.permute.xlu0 %1147
    %v1151 = vsel %vm206, %v914, 0
    %1153 = vmatprep.subr.mxu0 0.0
    %1154 = vmatpush1.msra.mxu0 0.0
    %1155 = vmatprep.subr.mxu0 0.0
    %1156 = vmatpush1.msra.mxu0 0.0
    %1157 = vmatprep.subr.mxu0 0.0
    %1158 = vmatpush1.msra.mxu0 0.0
    %1159 = vmatprep.subr.mxu0 0.0
    %1160 = vmatpush1.msra.mxu0 0.0
    %1161 = vmatprep.subr.mxu0 0.0
    %1162 = vmatpush1.msra.mxu0 0.0
    %1163 = vmatprep.subr.mxu0 0.0
    %1164 = vmatpush1.msra.mxu0 0.0
    %1165 = vmatprep.subr.mxu0 0.0
    %1166 = vmatpush1.msra.mxu0 0.0
    %1167 = vmatprep.subr.mxu0 0.0
    %1168 = vmatpush1.msra.mxu0 0.0
    %1169 = vmatprep.subr.mxu0 0.0
    %1170 = vmatpush1.msra.mxu0 0.0
    %1171 = vmatprep.subr.mxu0 0.0
    %1172 = vmatpush1.msra.mxu0 0.0
    %1173 = vmatprep.subr.mxu0 0.0
    %1174 = vmatpush1.msra.mxu0 0.0
    %1175 = vmatprep.subr.mxu0 0.0
    %1176 = vmatpush1.msra.mxu0 0.0
    %1177 = vmatprep.subr.mxu0 0.0
    %1178 = vmatpush1.msra.mxu0 0.0
    %1179 = vmatprep.subr.mxu0 0.0
    %1180 = vmatpush1.msra.mxu0 0.0
    %1181 = vmatprep.subr.mxu0 0.0
    %1182 = vmatpush1.msra.mxu0 0.0
    %1183 = vmatprep.subr.mxu0 0.0
    %1184 = vmatpush1.msra.mxu0 %v1148
    %1185 = vmatprep.subr.mxu0 0.0
    %1186 = vmatpush2.msra.mxu0 0.0
    %1187 = vmatprep.subr.mxu0 0.0
    %1188 = vmatpush2.msra.mxu0 0.0
    %1189 = vmatprep.subr.mxu0 0.0
    %1190 = vmatpush2.msra.mxu0 0.0
    %1191 = vmatprep.subr.mxu0 0.0
    %1192 = vmatpush2.msra.mxu0 0.0
    %1193 = vmatprep.subr.mxu0 0.0
    %1194 = vmatpush2.msra.mxu0 0.0
    %1195 = vmatprep.subr.mxu0 0.0
    %1196 = vmatpush2.msra.mxu0 0.0
    %1197 = vmatprep.subr.mxu0 0.0
    %1198 = vmatpush2.msra.mxu0 0.0
    %1199 = vmatprep.subr.mxu0 0.0
    %1200 = vmatpush2.msra.mxu0 0.0
    %1201 = vmatprep.subr.mxu0 0.0
    %1202 = vmatpush2.msra.mxu0 0.0
    %1203 = vmatprep.subr.mxu0 0.0
    %1204 = vmatpush2.msra.mxu0 0.0
    %1205 = vmatprep.subr.mxu0 0.0
    %1206 = vmatpush2.msra.mxu0 0.0
    %1207 = vmatprep.subr.mxu0 0.0
    %1208 = vmatpush2.msra.mxu0 0.0
    %1209 = vmatprep.subr.mxu0 0.0
    %1210 = vmatpush2.msra.mxu0 0.0
    %1211 = vmatprep.subr.mxu0 0.0
    %1212 = vmatpush2.msra.mxu0 0.0
    %1213 = vmatprep.subr.mxu0 0.0
    %1214 = vmatpush2.msra.mxu0 0.0
    %1215 = vmatprep.subr.mxu0 0.0
    %1216 = vmatpush2.msra.mxu0 0.0
    %1217 = vmatprep.mubr.f32.mxu0 0.0
    %1218 = vmatmul.mubr.f32.gmra.mxu0 %v1151
    %v1219 = vpop.f32.mrf.mxu0
    %v1220 = vadd.f32 0.0, %v1219
    %v1221 = vpop.f32.mrf.mxu0
    %1222 = vdwg.mxu0
    %1223 = vrot.lane.b32.xlu0 %v182, 64
    %v1224 = vpop.permute.xlu0 %1223
    %v1227 = vsel %vm206, %v915, 0
    %1229 = vmatprep.subr.mxu0 0.0
    %1230 = vmatpush1.msra.mxu0 0.0
    %1231 = vmatprep.subr.mxu0 0.0
    %1232 = vmatpush1.msra.mxu0 0.0
    %1233 = vmatprep.subr.mxu0 0.0
    %1234 = vmatpush1.msra.mxu0 0.0
    %1235 = vmatprep.subr.mxu0 0.0
    %1236 = vmatpush1.msra.mxu0 0.0
    %1237 = vmatprep.subr.mxu0 0.0
    %1238 = vmatpush1.msra.mxu0 0.0
    %1239 = vmatprep.subr.mxu0 0.0
    %1240 = vmatpush1.msra.mxu0 0.0
    %1241 = vmatprep.subr.mxu0 0.0
    %1242 = vmatpush1.msra.mxu0 0.0
    %1243 = vmatprep.subr.mxu0 0.0
    %1244 = vmatpush1.msra.mxu0 0.0
    %1245 = vmatprep.subr.mxu0 0.0
    %1246 = vmatpush1.msra.mxu0 0.0
    %1247 = vmatprep.subr.mxu0 0.0
    %1248 = vmatpush1.msra.mxu0 0.0
    %1249 = vmatprep.subr.mxu0 0.0
    %1250 = vmatpush1.msra.mxu0 0.0
    %1251 = vmatprep.subr.mxu0 0.0
    %1252 = vmatpush1.msra.mxu0 0.0
    %1253 = vmatprep.subr.mxu0 0.0
    %1254 = vmatpush1.msra.mxu0 0.0
    %1255 = vmatprep.subr.mxu0 0.0
    %1256 = vmatpush1.msra.mxu0 0.0
    %1257 = vmatprep.subr.mxu0 0.0
    %1258 = vmatpush1.msra.mxu0 0.0
    %1259 = vmatprep.subr.mxu0 0.0
    %1260 = vmatpush1.msra.mxu0 %v1224
    %1261 = vmatprep.subr.mxu0 0.0
    %1262 = vmatpush2.msra.mxu0 0.0
    %1263 = vmatprep.subr.mxu0 0.0
    %1264 = vmatpush2.msra.mxu0 0.0
    %1265 = vmatprep.subr.mxu0 0.0
    %1266 = vmatpush2.msra.mxu0 0.0
    %1267 = vmatprep.subr.mxu0 0.0
    %1268 = vmatpush2.msra.mxu0 0.0
    %1269 = vmatprep.subr.mxu0 0.0
    %1270 = vmatpush2.msra.mxu0 0.0
    %1271 = vmatprep.subr.mxu0 0.0
    %1272 = vmatpush2.msra.mxu0 0.0
    %1273 = vmatprep.subr.mxu0 0.0
    %1274 = vmatpush2.msra.mxu0 0.0
    %1275 = vmatprep.subr.mxu0 0.0
    %1276 = vmatpush2.msra.mxu0 0.0
    %1277 = vmatprep.subr.mxu0 0.0
    %1278 = vmatpush2.msra.mxu0 0.0
    %1279 = vmatprep.subr.mxu0 0.0
    %1280 = vmatpush2.msra.mxu0 0.0
    %1281 = vmatprep.subr.mxu0 0.0
    %1282 = vmatpush2.msra.mxu0 0.0
    %1283 = vmatprep.subr.mxu0 0.0
    %1284 = vmatpush2.msra.mxu0 0.0
    %1285 = vmatprep.subr.mxu0 0.0
    %1286 = vmatpush2.msra.mxu0 0.0
    %1287 = vmatprep.subr.mxu0 0.0
    %1288 = vmatpush2.msra.mxu0 0.0
    %1289 = vmatprep.subr.mxu0 0.0
    %1290 = vmatpush2.msra.mxu0 0.0
    %1291 = vmatprep.subr.mxu0 0.0
    %1292 = vmatpush2.msra.mxu0 0.0
    %1293 = vmatprep.mubr.f32.mxu0 0.0
    %1294 = vmatmul.mubr.f32.gmra.mxu0 %v1227
    %v1295 = vpop.f32.mrf.mxu0
    %v1296 = vadd.f32 0.0, %v1295
    %v1297 = vpop.f32.mrf.mxu0
    %1298 = vdwg.mxu0
    %1299 = vrot.lane.b32.xlu0 %v194, 64
    %v1300 = vpop.permute.xlu0 %1299
    %v1303 = vsel %vm206, %v916, 0
    %1305 = vmatprep.subr.mxu0 0.0
    %1306 = vmatpush1.msra.mxu0 0.0
    %1307 = vmatprep.subr.mxu0 0.0
    %1308 = vmatpush1.msra.mxu0 0.0
    %1309 = vmatprep.subr.mxu0 0.0
    %1310 = vmatpush1.msra.mxu0 0.0
    %1311 = vmatprep.subr.mxu0 0.0
    %1312 = vmatpush1.msra.mxu0 0.0
    %1313 = vmatprep.subr.mxu0 0.0
    %1314 = vmatpush1.msra.mxu0 0.0
    %1315 = vmatprep.subr.mxu0 0.0
    %1316 = vmatpush1.msra.mxu0 0.0
    %1317 = vmatprep.subr.mxu0 0.0
    %1318 = vmatpush1.msra.mxu0 0.0
    %1319 = vmatprep.subr.mxu0 0.0
    %1320 = vmatpush1.msra.mxu0 0.0
    %1321 = vmatprep.subr.mxu0 0.0
    %1322 = vmatpush1.msra.mxu0 0.0
    %1323 = vmatprep.subr.mxu0 0.0
    %1324 = vmatpush1.msra.mxu0 0.0
    %1325 = vmatprep.subr.mxu0 0.0
    %1326 = vmatpush1.msra.mxu0 0.0
    %1327 = vmatprep.subr.mxu0 0.0
    %1328 = vmatpush1.msra.mxu0 0.0
    %1329 = vmatprep.subr.mxu0 0.0
    %1330 = vmatpush1.msra.mxu0 0.0
    %1331 = vmatprep.subr.mxu0 0.0
    %1332 = vmatpush1.msra.mxu0 0.0
    %1333 = vmatprep.subr.mxu0 0.0
    %1334 = vmatpush1.msra.mxu0 0.0
    %1335 = vmatprep.subr.mxu0 0.0
    %1336 = vmatpush1.msra.mxu0 %v1300
    %1337 = vmatprep.subr.mxu0 0.0
    %1338 = vmatpush2.msra.mxu0 0.0
    %1339 = vmatprep.subr.mxu0 0.0
    %1340 = vmatpush2.msra.mxu0 0.0
    %1341 = vmatprep.subr.mxu0 0.0
    %1342 = vmatpush2.msra.mxu0 0.0
    %1343 = vmatprep.subr.mxu0 0.0
    %1344 = vmatpush2.msra.mxu0 0.0
    %1345 = vmatprep.subr.mxu0 0.0
    %1346 = vmatpush2.msra.mxu0 0.0
    %1347 = vmatprep.subr.mxu0 0.0
    %1348 = vmatpush2.msra.mxu0 0.0
    %1349 = vmatprep.subr.mxu0 0.0
    %1350 = vmatpush2.msra.mxu0 0.0
    %1351 = vmatprep.subr.mxu0 0.0
    %1352 = vmatpush2.msra.mxu0 0.0
    %1353 = vmatprep.subr.mxu0 0.0
    %1354 = vmatpush2.msra.mxu0 0.0
    %1355 = vmatprep.subr.mxu0 0.0
    %1356 = vmatpush2.msra.mxu0 0.0
    %1357 = vmatprep.subr.mxu0 0.0
    %1358 = vmatpush2.msra.mxu0 0.0
    %1359 = vmatprep.subr.mxu0 0.0
    %1360 = vmatpush2.msra.mxu0 0.0
    %1361 = vmatprep.subr.mxu0 0.0
    %1362 = vmatpush2.msra.mxu0 0.0
    %1363 = vmatprep.subr.mxu0 0.0
    %1364 = vmatpush2.msra.mxu0 0.0
    %1365 = vmatprep.subr.mxu0 0.0
    %1366 = vmatpush2.msra.mxu0 0.0
    %1367 = vmatprep.subr.mxu0 0.0
    %1368 = vmatpush2.msra.mxu0 0.0
    %1369 = vmatprep.mubr.f32.mxu0 0.0
    %1370 = vmatmul.mubr.f32.gmra.mxu0 %v1303
    %v1371 = vpop.f32.mrf.mxu0
    %v1372 = vadd.f32 0.0, %v1371
    %v1373 = vpop.f32.mrf.mxu0
    %1374 = vdwg.mxu0
    %1375 = vrot.lane.b32.xlu0 %v196, 64
    %v1376 = vpop.permute.xlu0 %1375
    %v1379 = vsel %vm206, %v917, 0
    %1381 = vmatprep.subr.mxu0 0.0
    %1382 = vmatpush1.msra.mxu0 0.0
    %1383 = vmatprep.subr.mxu0 0.0
    %1384 = vmatpush1.msra.mxu0 0.0
    %1385 = vmatprep.subr.mxu0 0.0
    %1386 = vmatpush1.msra.mxu0 0.0
    %1387 = vmatprep.subr.mxu0 0.0
    %1388 = vmatpush1.msra.mxu0 0.0
    %1389 = vmatprep.subr.mxu0 0.0
    %1390 = vmatpush1.msra.mxu0 0.0
    %1391 = vmatprep.subr.mxu0 0.0
    %1392 = vmatpush1.msra.mxu0 0.0
    %1393 = vmatprep.subr.mxu0 0.0
    %1394 = vmatpush1.msra.mxu0 0.0
    %1395 = vmatprep.subr.mxu0 0.0
    %1396 = vmatpush1.msra.mxu0 0.0
    %1397 = vmatprep.subr.mxu0 0.0
    %1398 = vmatpush1.msra.mxu0 0.0
    %1399 = vmatprep.subr.mxu0 0.0
    %1400 = vmatpush1.msra.mxu0 0.0
    %1401 = vmatprep.subr.mxu0 0.0
    %1402 = vmatpush1.msra.mxu0 0.0
    %1403 = vmatprep.subr.mxu0 0.0
    %1404 = vmatpush1.msra.mxu0 0.0
    %1405 = vmatprep.subr.mxu0 0.0
    %1406 = vmatpush1.msra.mxu0 0.0
    %1407 = vmatprep.subr.mxu0 0.0
    %1408 = vmatpush1.msra.mxu0 0.0
    %1409 = vmatprep.subr.mxu0 0.0
    %1410 = vmatpush1.msra.mxu0 0.0
    %1411 = vmatprep.subr.mxu0 0.0
    %1412 = vmatpush1.msra.mxu0 %v1376
    %1413 = vmatprep.subr.mxu0 0.0
    %1414 = vmatpush2.msra.mxu0 0.0
    %1415 = vmatprep.subr.mxu0 0.0
    %1416 = vmatpush2.msra.mxu0 0.0
    %1417 = vmatprep.subr.mxu0 0.0
    %1418 = vmatpush2.msra.mxu0 0.0
    %1419 = vmatprep.subr.mxu0 0.0
    %1420 = vmatpush2.msra.mxu0 0.0
    %1421 = vmatprep.subr.mxu0 0.0
    %1422 = vmatpush2.msra.mxu0 0.0
    %1423 = vmatprep.subr.mxu0 0.0
    %1424 = vmatpush2.msra.mxu0 0.0
    %1425 = vmatprep.subr.mxu0 0.0
    %1426 = vmatpush2.msra.mxu0 0.0
    %1427 = vmatprep.subr.mxu0 0.0
    %1428 = vmatpush2.msra.mxu0 0.0
    %1429 = vmatprep.subr.mxu0 0.0
    %1430 = vmatpush2.msra.mxu0 0.0
    %1431 = vmatprep.subr.mxu0 0.0
    %1432 = vmatpush2.msra.mxu0 0.0
    %1433 = vmatprep.subr.mxu0 0.0
    %1434 = vmatpush2.msra.mxu0 0.0
    %1435 = vmatprep.subr.mxu0 0.0
    %1436 = vmatpush2.msra.mxu0 0.0
    %1437 = vmatprep.subr.mxu0 0.0
    %1438 = vmatpush2.msra.mxu0 0.0
    %1439 = vmatprep.subr.mxu0 0.0
    %1440 = vmatpush2.msra.mxu0 0.0
    %1441 = vmatprep.subr.mxu0 0.0
    %1442 = vmatpush2.msra.mxu0 0.0
    %1443 = vmatprep.subr.mxu0 0.0
    %1444 = vmatpush2.msra.mxu0 0.0
    %1445 = vmatprep.mubr.f32.mxu0 0.0
    %1446 = vmatmul.mubr.f32.gmra.mxu0 %v1379
    %v1447 = vpop.f32.mrf.mxu0
    %v1448 = vadd.f32 0.0, %v1447
    %v1449 = vpop.f32.mrf.mxu0
    %1450 = vdwg.mxu0
    %1451 = vrot.lane.b32.xlu0 %v198, 64
    %v1452 = vpop.permute.xlu0 %1451
    %v1455 = vsel %vm206, %v918, 0
    %1457 = vmatprep.subr.mxu0 0.0
    %1458 = vmatpush1.msra.mxu0 0.0
    %1459 = vmatprep.subr.mxu0 0.0
    %1460 = vmatpush1.msra.mxu0 0.0
    %1461 = vmatprep.subr.mxu0 0.0
    %1462 = vmatpush1.msra.mxu0 0.0
    %1463 = vmatprep.subr.mxu0 0.0
    %1464 = vmatpush1.msra.mxu0 0.0
    %1465 = vmatprep.subr.mxu0 0.0
    %1466 = vmatpush1.msra.mxu0 0.0
    %1467 = vmatprep.subr.mxu0 0.0
    %1468 = vmatpush1.msra.mxu0 0.0
    %1469 = vmatprep.subr.mxu0 0.0
    %1470 = vmatpush1.msra.mxu0 0.0
    %1471 = vmatprep.subr.mxu0 0.0
    %1472 = vmatpush1.msra.mxu0 0.0
    %1473 = vmatprep.subr.mxu0 0.0
    %1474 = vmatpush1.msra.mxu0 0.0
    %1475 = vmatprep.subr.mxu0 0.0
    %1476 = vmatpush1.msra.mxu0 0.0
    %1477 = vmatprep.subr.mxu0 0.0
    %1478 = vmatpush1.msra.mxu0 0.0
    %1479 = vmatprep.subr.mxu0 0.0
    %1480 = vmatpush1.msra.mxu0 0.0
    %1481 = vmatprep.subr.mxu0 0.0
    %1482 = vmatpush1.msra.mxu0 0.0
    %1483 = vmatprep.subr.mxu0 0.0
    %1484 = vmatpush1.msra.mxu0 0.0
    %1485 = vmatprep.subr.mxu0 0.0
    %1486 = vmatpush1.msra.mxu0 0.0
    %1487 = vmatprep.subr.mxu0 0.0
    %1488 = vmatpush1.msra.mxu0 %v1452
    %1489 = vmatprep.subr.mxu0 0.0
    %1490 = vmatpush2.msra.mxu0 0.0
    %1491 = vmatprep.subr.mxu0 0.0
    %1492 = vmatpush2.msra.mxu0 0.0
    %1493 = vmatprep.subr.mxu0 0.0
    %1494 = vmatpush2.msra.mxu0 0.0
    %1495 = vmatprep.subr.mxu0 0.0
    %1496 = vmatpush2.msra.mxu0 0.0
    %1497 = vmatprep.subr.mxu0 0.0
    %1498 = vmatpush2.msra.mxu0 0.0
    %1499 = vmatprep.subr.mxu0 0.0
    %1500 = vmatpush2.msra.mxu0 0.0
    %1501 = vmatprep.subr.mxu0 0.0
    %1502 = vmatpush2.msra.mxu0 0.0
    %1503 = vmatprep.subr.mxu0 0.0
    %1504 = vmatpush2.msra.mxu0 0.0
    %1505 = vmatprep.subr.mxu0 0.0
    %1506 = vmatpush2.msra.mxu0 0.0
    %1507 = vmatprep.subr.mxu0 0.0
    %1508 = vmatpush2.msra.mxu0 0.0
    %1509 = vmatprep.subr.mxu0 0.0
    %1510 = vmatpush2.msra.mxu0 0.0
    %1511 = vmatprep.subr.mxu0 0.0
    %1512 = vmatpush2.msra.mxu0 0.0
    %1513 = vmatprep.subr.mxu0 0.0
    %1514 = vmatpush2.msra.mxu0 0.0
    %1515 = vmatprep.subr.mxu0 0.0
    %1516 = vmatpush2.msra.mxu0 0.0
    %1517 = vmatprep.subr.mxu0 0.0
    %1518 = vmatpush2.msra.mxu0 0.0
    %1519 = vmatprep.subr.mxu0 0.0
    %1520 = vmatpush2.msra.mxu0 0.0
    %1521 = vmatprep.mubr.f32.mxu0 0.0
    %1522 = vmatmul.mubr.f32.gmra.mxu0 %v1455
    %v1523 = vpop.f32.mrf.mxu0
    %v1524 = vadd.f32 0.0, %v1523
    %v1525 = vpop.f32.mrf.mxu0
    %1526 = vdwg.mxu0
    %1527 = vst.msk [vmem:[#allocation2] sm:$0xff] %vm206, %v992
    %1529 = vrot.lane.b32.xlu0 %v1068, 8
    %v1530 = vpop.permute.xlu0 %1529
    %vm1532 = vcmask 130112
    %1533 = vst.msk [vmem:[#allocation2] sm:$0xff] %vm1532, %v1530
    %1535 = vrot.lane.b32.xlu0 %v1144, 16
    %v1536 = vpop.permute.xlu0 %1535
    %vm1538 = vcmask 195712
    %1539 = vst.msk [vmem:[#allocation2] sm:$0xff] %vm1538, %v1536
    %1541 = vrot.lane.b32.xlu0 %v1220, 24
    %v1542 = vpop.permute.xlu0 %1541
    %vm1544 = vcmask 261312
    %1545 = vst.msk [vmem:[#allocation2] sm:$0xff] %vm1544, %v1542
    %1546 = vst.msk [vmem:[#allocation2 + $0x8] sm:$0xff] %vm206, %v1296
    %1548 = vrot.lane.b32.xlu0 %v1372, 8
    %v1549 = vpop.permute.xlu0 %1548
    %1551 = vst.msk [vmem:[#allocation2 + $0x8] sm:$0xff] %vm1532, %v1549
    %1553 = vrot.lane.b32.xlu0 %v1448, 16
    %v1554 = vpop.permute.xlu0 %1553
    %1556 = vst.msk [vmem:[#allocation2 + $0x8] sm:$0xff] %vm1538, %v1554
    %1558 = vrot.lane.b32.xlu0 %v1524, 24
    %v1559 = vpop.permute.xlu0 %1558
    %1561 = vst.msk [vmem:[#allocation2 + $0x8] sm:$0xff] %vm1544, %v1559
    %v1562 = vld [vmem:[#allocation2] sm:$0xff]
    %v1563 = vld [vmem:[#allocation2 + $0x8] sm:$0xff]
    %v1564 = vld [vmem:[%s5] sm:$0xff]
    %v1565 = vld [vmem:[%s5 + $0x8] sm:$0xff]
    %v1566 = vld [vmem:[%s5 + $0x10] sm:$0xff]
    %v1567 = vld [vmem:[%s5 + $0x18] sm:$0xff]
    %v1568 = vld [vmem:[%s6] sm:$0x1]
    %v1570 = vlaneseq
    %v1571 = vshrl.u32 %v1570, 7
    %v1572 = vsub.s32 0, %v1571
    %v1573 = vrot.slane %v1568, %v1572
    %v1576 = vsel %vm49, %v1562, 0
    %v1579 = vsel %vm49, %v1563, 0
    %1581 = vmatprep.subr.mxu0 0.0
    %1582 = vmatpush1.msra.mxu0 0.0
    %1583 = vmatprep.subr.mxu0 0.0
    %1584 = vmatpush1.msra.mxu0 0.0
    %1585 = vmatprep.subr.mxu0 0.0
    %1586 = vmatpush1.msra.mxu0 0.0
    %1587 = vmatprep.subr.mxu0 0.0
    %1588 = vmatpush1.msra.mxu0 0.0
    %1589 = vmatprep.subr.mxu0 0.0
    %1590 = vmatpush1.msra.mxu0 0.0
    %1591 = vmatprep.subr.mxu0 0.0
    %1592 = vmatpush1.msra.mxu0 0.0
    %1593 = vmatprep.subr.mxu0 0.0
    %1594 = vmatpush1.msra.mxu0 0.0
    %1595 = vmatprep.subr.mxu0 0.0
    %1596 = vmatpush1.msra.mxu0 0.0
    %1597 = vmatprep.subr.mxu0 0.0
    %1598 = vmatpush1.msra.mxu0 0.0
    %1599 = vmatprep.subr.mxu0 0.0
    %1600 = vmatpush1.msra.mxu0 0.0
    %1601 = vmatprep.subr.mxu0 0.0
    %1602 = vmatpush1.msra.mxu0 0.0
    %1603 = vmatprep.subr.mxu0 0.0
    %1604 = vmatpush1.msra.mxu0 0.0
    %1605 = vmatprep.subr.mxu0 0.0
    %1606 = vmatpush1.msra.mxu0 %v1567
    %1607 = vmatprep.subr.mxu0 0.0
    %1608 = vmatpush1.msra.mxu0 %v1566
    %1609 = vmatprep.subr.mxu0 0.0
    %1610 = vmatpush1.msra.mxu0 %v1565
    %1611 = vmatprep.subr.mxu0 0.0
    %1612 = vmatpush1.msra.mxu0 %v1564
    %1613 = vmatprep.subr.mxu0 0.0
    %1614 = vmatpush2.msra.mxu0 0.0
    %1615 = vmatprep.subr.mxu0 0.0
    %1616 = vmatpush2.msra.mxu0 0.0
    %1617 = vmatprep.subr.mxu0 0.0
    %1618 = vmatpush2.msra.mxu0 0.0
    %1619 = vmatprep.subr.mxu0 0.0
    %1620 = vmatpush2.msra.mxu0 0.0
    %1621 = vmatprep.subr.mxu0 0.0
    %1622 = vmatpush2.msra.mxu0 0.0
    %1623 = vmatprep.subr.mxu0 0.0
    %1624 = vmatpush2.msra.mxu0 0.0
    %1625 = vmatprep.subr.mxu0 0.0
    %1626 = vmatpush2.msra.mxu0 0.0
    %1627 = vmatprep.subr.mxu0 0.0
    %1628 = vmatpush2.msra.mxu0 0.0
    %1629 = vmatprep.subr.mxu0 0.0
    %1630 = vmatpush2.msra.mxu0 0.0
    %1631 = vmatprep.subr.mxu0 0.0
    %1632 = vmatpush2.msra.mxu0 0.0
    %1633 = vmatprep.subr.mxu0 0.0
    %1634 = vmatpush2.msra.mxu0 0.0
    %1635 = vmatprep.subr.mxu0 0.0
    %1636 = vmatpush2.msra.mxu0 0.0
    %1637 = vmatprep.subr.mxu0 0.0
    %1638 = vmatpush2.msra.mxu0 0.0
    %1639 = vmatprep.subr.mxu0 0.0
    %1640 = vmatpush2.msra.mxu0 0.0
    %1641 = vmatprep.subr.mxu0 0.0
    %1642 = vmatpush2.msra.mxu0 0.0
    %1643 = vmatprep.subr.mxu0 0.0
    %1644 = vmatpush2.msra.mxu0 0.0
    %1645 = vmatprep.mubr.f32.mxu0 0.0
    %1646 = vmatmul.mubr.f32.gmra.mxu0 %v1576
    %v1647 = vpop.f32.mrf.mxu0
    %v1648 = vadd.f32 %v1573, %v1647
    %v1649 = vpop.f32.mrf.mxu0
    %1650 = vmatprep.mubr.f32.mxu0 0.0
    %1651 = vmatmul.mubr.f32.gmra.mxu0 %v1579
    %v1652 = vpop.f32.mrf.mxu0
    %v1653 = vadd.f32 %v1573, %v1652
    %v1654 = vpop.f32.mrf.mxu0
    %1655 = vdwg.mxu0
    %v1656 = vadd.f32 %v45, %v1648
    %v1657 = vadd.f32 %v46, %v1653
    %v1658 = vld [vmem:[%s7] sm:$0x1]
    %v1659 = vld [vmem:[%s8] sm:$0x1]
    %v1660 = vsel %vm49, %v1656, 0.0
    %1661 = vadd.xlane.f32.xlu0 %v1660
    %v1662 = vpop.xlane.xlu0 %1661
    %v1663 = vsel %vm49, %v1657, 0.0
    %1664 = vadd.xlane.f32.xlu0 %v1663
    %v1665 = vpop.xlane.xlu0 %1664
    %v1666 = vmul.f32 %v1662, %v56
    %v1667 = vmul.f32 %v1665, %v56
    %v1668 = vsub.f32 %v1656, %v1666
    %v1669 = vsub.f32 %v1657, %v1667
    %v1670 = vmul.f32 %v1668, %v1668
    %v1671 = vmul.f32 %v1669, %v1669
    %v1672 = vsel %vm49, %v1670, 0.0
    %1673 = vadd.xlane.f32.xlu0 %v1672
    %v1674 = vpop.xlane.xlu0 %1673
    %v1675 = vsel %vm49, %v1671, 0.0
    %1676 = vadd.xlane.f32.xlu0 %v1675
    %v1677 = vpop.xlane.xlu0 %1676
    %v1678 = vmul.f32 %v1674, %v56
    %v1679 = vmul.f32 %v1677, %v56
    %v1680 = vadd.f32 %v1678, 1e-05
    %v1681 = vadd.f32 %v1679, 1e-05
    %v1682 = vrsqrt.pop %v1680
    %v1683 = vrsqrt.pop %v1681
    %v1684 = vmul.f32 %v1668, %v1682
    %v1685 = vmul.f32 %v1669, %v1683
    %v1687 = vlaneseq
    %v1688 = vshrl.u32 %v1687, 7
    %v1689 = vsub.s32 0, %v1688
    %v1690 = vrot.slane %v1658, %v1689
    %v1692 = vmul.f32 %v1684, %v1690
    %v1693 = vmul.f32 %v1685, %v1690
    %v1695 = vlaneseq
    %v1696 = vshrl.u32 %v1695, 7
    %v1697 = vsub.s32 0, %v1696
    %v1698 = vrot.slane %v1659, %v1697
    %v1700 = vadd.f32 %v1692, %v1698
    %v1701 = vadd.f32 %v1693, %v1698
    %v1702 = vld [vmem:[%s9] sm:$0xff]
    %v1703 = vld [vmem:[%s9 + $0x8] sm:$0xff]
    %v1704 = vld [vmem:[%s9 + $0x10] sm:$0xff]
    %v1705 = vld [vmem:[%s9 + $0x18] sm:$0xff]
    %v1706 = vld [vmem:[%s10] sm:$0x1]
    %v1708 = vlaneseq
    %v1709 = vshrl.u32 %v1708, 7
    %v1710 = vsub.s32 0, %v1709
    %v1711 = vrot.slane %v1706, %v1710
    %v1714 = vsel %vm49, %v1700, 0
    %v1717 = vsel %vm49, %v1701, 0
    %1719 = vmatprep.subr.mxu0 0.0
    %1720 = vmatpush1.msra.mxu0 0.0
    %1721 = vmatprep.subr.mxu0 0.0
    %1722 = vmatpush1.msra.mxu0 0.0
    %1723 = vmatprep.subr.mxu0 0.0
    %1724 = vmatpush1.msra.mxu0 0.0
    %1725 = vmatprep.subr.mxu0 0.0
    %1726 = vmatpush1.msra.mxu0 0.0
    %1727 = vmatprep.subr.mxu0 0.0
    %1728 = vmatpush1.msra.mxu0 0.0
    %1729 = vmatprep.subr.mxu0 0.0
    %1730 = vmatpush1.msra.mxu0 0.0
    %1731 = vmatprep.subr.mxu0 0.0
    %1732 = vmatpush1.msra.mxu0 0.0
    %1733 = vmatprep.subr.mxu0 0.0
    %1734 = vmatpush1.msra.mxu0 0.0
    %1735 = vmatprep.subr.mxu0 0.0
    %1736 = vmatpush1.msra.mxu0 0.0
    %1737 = vmatprep.subr.mxu0 0.0
    %1738 = vmatpush1.msra.mxu0 0.0
    %1739 = vmatprep.subr.mxu0 0.0
    %1740 = vmatpush1.msra.mxu0 0.0
    %1741 = vmatprep.subr.mxu0 0.0
    %1742 = vmatpush1.msra.mxu0 0.0
    %1743 = vmatprep.subr.mxu0 0.0
    %1744 = vmatpush1.msra.mxu0 %v1705
    %1745 = vmatprep.subr.mxu0 0.0
    %1746 = vmatpush1.msra.mxu0 %v1704
    %1747 = vmatprep.subr.mxu0 0.0
    %1748 = vmatpush1.msra.mxu0 %v1703
    %1749 = vmatprep.subr.mxu0 0.0
    %1750 = vmatpush1.msra.mxu0 %v1702
    %1751 = vmatprep.subr.mxu0 0.0
    %1752 = vmatpush2.msra.mxu0 0.0
    %1753 = vmatprep.subr.mxu0 0.0
    %1754 = vmatpush2.msra.mxu0 0.0
    %1755 = vmatprep.subr.mxu0 0.0
    %1756 = vmatpush2.msra.mxu0 0.0
    %1757 = vmatprep.subr.mxu0 0.0
    %1758 = vmatpush2.msra.mxu0 0.0
    %1759 = vmatprep.subr.mxu0 0.0
    %1760 = vmatpush2.msra.mxu0 0.0
    %1761 = vmatprep.subr.mxu0 0.0
    %1762 = vmatpush2.msra.mxu0 0.0
    %1763 = vmatprep.subr.mxu0 0.0
    %1764 = vmatpush2.msra.mxu0 0.0
    %1765 = vmatprep.subr.mxu0 0.0
    %1766 = vmatpush2.msra.mxu0 0.0
    %1767 = vmatprep.subr.mxu0 0.0
    %1768 = vmatpush2.msra.mxu0 0.0
    %1769 = vmatprep.subr.mxu0 0.0
    %1770 = vmatpush2.msra.mxu0 0.0
    %1771 = vmatprep.subr.mxu0 0.0
    %1772 = vmatpush2.msra.mxu0 0.0
    %1773 = vmatprep.subr.mxu0 0.0
    %1774 = vmatpush2.msra.mxu0 0.0
    %1775 = vmatprep.subr.mxu0 0.0
    %1776 = vmatpush2.msra.mxu0 0.0
    %1777 = vmatprep.subr.mxu0 0.0
    %1778 = vmatpush2.msra.mxu0 0.0
    %1779 = vmatprep.subr.mxu0 0.0
    %1780 = vmatpush2.msra.mxu0 0.0
    %1781 = vmatprep.subr.mxu0 0.0
    %1782 = vmatpush2.msra.mxu0 0.0
    %1783 = vmatprep.mubr.f32.mxu0 0.0
    %1784 = vmatmul.mubr.f32.gmra.mxu0 %v1714
    %v1785 = vpop.f32.mrf.mxu0
    %v1786 = vadd.f32 %v1711, %v1785
    %v1787 = vpop.f32.mrf.mxu0
    %1788 = vmatprep.mubr.f32.mxu0 0.0
    %1789 = vmatmul.mubr.f32.gmra.mxu0 %v1717
    %v1790 = vpop.f32.mrf.mxu0
    %v1791 = vadd.f32 %v1711, %v1790
    %v1792 = vpop.f32.mrf.mxu0
    %1793 = vdwg.mxu0
    %v1794 = vmul.f32 %v1786, 0.5
    %v1795 = vmul.f32 %v1791, 0.5
    %v1796 = vmul.f32 %v1786, %v1786
    %v1797 = vmul.f32 %v1791, %v1791
    %v1798 = vmul.f32 %v1786, %v1796
    %v1799 = vmul.f32 %v1791, %v1797
    %v1800 = vmul.f32 %v1798, 0.044715
    %v1801 = vmul.f32 %v1799, 0.044715
    %v1802 = vadd.f32 %v1786, %v1800
    %v1803 = vadd.f32 %v1791, %v1801
    %v1804 = vmul.f32 %v1802, 0.7978845
    %v1805 = vmul.f32 %v1803, 0.7978845
    %v1806 = vtanh.pop %v1804
    %v1807 = vtanh.pop %v1805
    %v1808 = vadd.f32 %v1806, 1.0
    %v1809 = vadd.f32 %v1807, 1.0
    %v1810 = vmul.f32 %v1794, %v1808
    %v1811 = vmul.f32 %v1795, %v1809
    %v1812 = vld [vmem:[%s11] sm:$0xff]
    %v1813 = vld [vmem:[%s11 + $0x8] sm:$0xff]
    %v1814 = vld [vmem:[%s11 + $0x10] sm:$0xff]
    %v1815 = vld [vmem:[%s11 + $0x18] sm:$0xff]
    %v1816 = vld [vmem:[%s11 + $0x20] sm:$0xff]
    %v1817 = vld [vmem:[%s11 + $0x28] sm:$0xff]
    %v1818 = vld [vmem:[%s11 + $0x30] sm:$0xff]
    %v1819 = vld [vmem:[%s11 + $0x38] sm:$0xff]
    %v1820 = vld [vmem:[%s11 + $0x40] sm:$0xff]
    %v1821 = vld [vmem:[%s11 + $0x48] sm:$0xff]
    %v1822 = vld [vmem:[%s11 + $0x50] sm:$0xff]
    %v1823 = vld [vmem:[%s11 + $0x58] sm:$0xff]
    %v1824 = vld [vmem:[%s11 + $0x60] sm:$0xff]
    %v1825 = vld [vmem:[%s11 + $0x68] sm:$0xff]
    %v1826 = vld [vmem:[%s11 + $0x70] sm:$0xff]
    %v1827 = vld [vmem:[%s11 + $0x78] sm:$0xff]
    %v1828 = vld [vmem:[%s12] sm:$0x1]
    %v1830 = vlaneseq
    %v1831 = vshrl.u32 %v1830, 7
    %v1832 = vsub.s32 0, %v1831
    %v1833 = vrot.slane %v1828, %v1832
    %1835 = vmatprep.subr.mxu0 0.0
    %1836 = vmatpush1.msra.mxu0 %v1827
    %1837 = vmatprep.subr.mxu0 0.0
    %1838 = vmatpush1.msra.mxu0 %v1826
    %1839 = vmatprep.subr.mxu0 0.0
    %1840 = vmatpush1.msra.mxu0 %v1825
    %1841 = vmatprep.subr.mxu0 0.0
    %1842 = vmatpush1.msra.mxu0 %v1824
    %1843 = vmatprep.subr.mxu0 0.0
    %1844 = vmatpush1.msra.mxu0 %v1823
    %1845 = vmatprep.subr.mxu0 0.0
    %1846 = vmatpush1.msra.mxu0 %v1822
    %1847 = vmatprep.subr.mxu0 0.0
    %1848 = vmatpush1.msra.mxu0 %v1821
    %1849 = vmatprep.subr.mxu0 0.0
    %1850 = vmatpush1.msra.mxu0 %v1820
    %1851 = vmatprep.subr.mxu0 0.0
    %1852 = vmatpush1.msra.mxu0 %v1819
    %1853 = vmatprep.subr.mxu0 0.0
    %1854 = vmatpush1.msra.mxu0 %v1818
    %1855 = vmatprep.subr.mxu0 0.0
    %1856 = vmatpush1.msra.mxu0 %v1817
    %1857 = vmatprep.subr.mxu0 0.0
    %1858 = vmatpush1.msra.mxu0 %v1816
    %1859 = vmatprep.subr.mxu0 0.0
    %1860 = vmatpush1.msra.mxu0 %v1815
    %1861 = vmatprep.subr.mxu0 0.0
    %1862 = vmatpush1.msra.mxu0 %v1814
    %1863 = vmatprep.subr.mxu0 0.0
    %1864 = vmatpush1.msra.mxu0 %v1813
    %1865 = vmatprep.subr.mxu0 0.0
    %1866 = vmatpush1.msra.mxu0 %v1812
    %1867 = vmatprep.subr.mxu0 0.0
    %1868 = vmatpush2.msra.mxu0 0.0
    %1869 = vmatprep.subr.mxu0 0.0
    %1870 = vmatpush2.msra.mxu0 0.0
    %1871 = vmatprep.subr.mxu0 0.0
    %1872 = vmatpush2.msra.mxu0 0.0
    %1873 = vmatprep.subr.mxu0 0.0
    %1874 = vmatpush2.msra.mxu0 0.0
    %1875 = vmatprep.subr.mxu0 0.0
    %1876 = vmatpush2.msra.mxu0 0.0
    %1877 = vmatprep.subr.mxu0 0.0
    %1878 = vmatpush2.msra.mxu0 0.0
    %1879 = vmatprep.subr.mxu0 0.0
    %1880 = vmatpush2.msra.mxu0 0.0
    %1881 = vmatprep.subr.mxu0 0.0
    %1882 = vmatpush2.msra.mxu0 0.0
    %1883 = vmatprep.subr.mxu0 0.0
    %1884 = vmatpush2.msra.mxu0 0.0
    %1885 = vmatprep.subr.mxu0 0.0
    %1886 = vmatpush2.msra.mxu0 0.0
    %1887 = vmatprep.subr.mxu0 0.0
    %1888 = vmatpush2.msra.mxu0 0.0
    %1889 = vmatprep.subr.mxu0 0.0
    %1890 = vmatpush2.msra.mxu0 0.0
    %1891 = vmatprep.subr.mxu0 0.0
    %1892 = vmatpush2.msra.mxu0 0.0
    %1893 = vmatprep.subr.mxu0 0.0
    %1894 = vmatpush2.msra.mxu0 0.0
    %1895 = vmatprep.subr.mxu0 0.0
    %1896 = vmatpush2.msra.mxu0 0.0
    %1897 = vmatprep.subr.mxu0 0.0
    %1898 = vmatpush2.msra.mxu0 0.0
    %1899 = vmatprep.mubr.f32.mxu0 0.0
    %1900 = vmatmul.mubr.f32.gmra.mxu0 %v1810
    %v1901 = vpop.f32.mrf.mxu0
    %v1902 = vadd.f32 %v1833, %v1901
    %v1903 = vpop.f32.mrf.mxu0
    %1904 = vmatprep.mubr.f32.mxu0 0.0
    %1905 = vmatmul.mubr.f32.gmra.mxu0 %v1811
    %v1906 = vpop.f32.mrf.mxu0
    %v1907 = vadd.f32 %v1833, %v1906
    %v1908 = vpop.f32.mrf.mxu0
    %1909 = vdwg.mxu0
    %v1910 = vadd.f32 %v1656, %v1902
    %v1911 = vadd.f32 %v1657, %v1907
    %1912 = vst.msk [vmem:[#allocation3] sm:$0xff] %vm49, %v1910
    %1913 = vst.msk [vmem:[#allocation3 + $0x8] sm:$0xff] %vm49, %v1911
    // Predicated region
    $region54: #{tpu_custom_call.1} parent=1 // pred_check
      _
    $region55: #{tpu_custom_call.1} parent=1 // pred_check_branch
      %1915 = sbr.rel (0) target = $region57
    $region56: #{tpu_custom_call.1} parent=1 // pred_region
      %s1917 = ssub.s32 256, 256
      %1918 = vsyncadd [#allocation4], %s1917
      %s1919 = sshll.u32 [#allocation3], 4
      %s1920 = int_to_ptr.vmem [resolvable:$true] %s1919
      %1925 = dma.vmem_to_hbm [thread:$0]  %s1920, 256, %s13, [#allocation4], 128, 128, 8
    $region57: #{tpu_custom_call.1} parent=1 // pred_fallthru
      _
    // Predicated region
    $region58: #{tpu_custom_call.1} parent=1 // pred_check
      _
    $region59: #{tpu_custom_call.1} parent=1 // pred_check_branch
      %1927 = sbr.rel (0) target = $region61
    $region60: #{tpu_custom_call.1} parent=1 // pred_region
      %1928 = dma.done [#allocation4], 256
    $region61: #{tpu_custom_call.1} parent=1 // pred_fallthru
      _
    %1929 = vsyncpa [#allocation4], 1

</llo_original>
